<compile_context>
chip_gen: v6e
topology: v6e:2x2x1
jax: 0.10.0
libtpu: 0.0.40
codegen_flags: <defaults>
</compile_context>

<pallas_src>
import functools

import jax
import jax.numpy as jnp
from jax import lax
from jax.experimental import pallas as pl
from jax.experimental.pallas import tpu as pltpu


def _round_up(x, m):
    return (x + m - 1) // m * m


def _conv_block_kernel(x_ref, w_ref, scale_ref, bias_ref, o_ref, *,
                       H, W, Cin, TCout):
    """Fused 3x3 conv (pad=1) + folded BN affine + ReLU, one image / Cout tile.

    x_ref     : (1, H, W, Cin)    bf16 activations (NHWC, unpadded)
    w_ref     : (9*Cin, TCout)    bf16 weights, HWIO flattened onto the K axis
    scale_ref : (1, TCout)        f32 folded BN scale
    bias_ref  : (1, TCout)        f32 folded conv-bias + BN shift
    o_ref     : (1, H, W, TCout)  f32
    """
    # Shift/mask bookkeeping in f32 (exact for bf16 inputs, avoids packed-dtype
    # sublane edge cases); the MXU operands are cast back to bf16 below.
    x = x_ref[0].astype(jnp.float32)                       # (H, W, Cin)

    # dx = -1 / +1 realized with an XLU sublane rotate + edge mask
    # (no strided W-slices -> no per-tap VMEM copies).
    col = lax.broadcasted_iota(jnp.int32, (H, W, Cin), 1)
    zero = jnp.zeros_like(x)
    x_m1 = jnp.where(col >= 1, pltpu.roll(x, shift=1, axis=1), zero)        # x[:, w-1]
    x_p1 = jnp.where(col <= W - 2, pltpu.roll(x, shift=W - 1, axis=1), zero)  # x[:, w+1]
    shifted = (x_m1, x, x_p1)                              # kx = 0, 1, 2

    # dy = -1/0/+1: one zero row of in-VMEM padding + static row windows.
    zrow = jnp.zeros((1, W, Cin), x.dtype)
    xps = [jnp.concatenate([zrow, s, zrow], axis=0) for s in shifted]  # (H+2, W, Cin)

    # im2col with K = 9*Cin (order ky-major, kx-minor, channel fastest,
    # matching the (3,3,Cin,Cout) -> (9*Cin,Cout) weight reshape).
    taps = [xps[kx][ky:ky + H] for ky in range(3) for kx in range(3)]
    patches = jnp.concatenate(taps, axis=-1)               # (H, W, 9*Cin)
    lhs = patches.reshape(H * W, 9 * Cin).astype(jnp.bfloat16)

    # Single MXU contraction, f32 accumulation.
    acc = jnp.dot(lhs, w_ref[...], preferred_element_type=jnp.float32)  # (H*W, TCout)

    y = acc * scale_ref[...] + bias_ref[...]               # folded BatchNorm (f32)
    y = jnp.maximum(y, 0.0)                                # ReLU
    o_ref[0] = y.reshape(H, W, TCout).astype(o_ref.dtype)  # lane-dense store


def conv_block_forward(x_nchw, w_oihw, b_conv, gamma, beta, run_mean, run_var,
                       eps=1e-5):
    """Pallas implementation of ConvBlock.forward (NCHW in, NCHW out)."""
    N, Cin, H, W = x_nchw.shape
    Cout = w_oihw.shape[0]
    TCout = 128
    Cout_p = _round_up(Cout, TCout)

    # Layout glue (NCHW -> NHWC) + bf16 cast for HBM/DMA/MXU; params stay f32.
    x_nhwc = jnp.transpose(x_nchw, (0, 2, 3, 1)).astype(jnp.bfloat16)

    w_hwio = jnp.transpose(w_oihw, (2, 3, 1, 0))                      # OIHW -> HWIO
    w_hwio = jnp.pad(w_hwio, ((0, 0), (0, 0), (0, 0), (0, Cout_p - Cout)))
    w_mat = w_hwio.reshape(9 * Cin, Cout_p).astype(jnp.bfloat16)      # (9*Cin, Cout_p)

    scale = (gamma / jnp.sqrt(run_var + eps)).astype(jnp.float32)     # (Cout,)
    bias = ((b_conv - run_mean) * scale + beta).astype(jnp.float32)   # (Cout,)
    scale_p = jnp.pad(scale, (0, Cout_p - Cout))[None, :]
    bias_p = jnp.pad(bias, (0, Cout_p - Cout))[None, :]

    kernel = functools.partial(_conv_block_kernel, H=H, W=W, Cin=Cin, TCout=TCout)

    # TODO(synk): for large FPN feature maps, add an H-tile grid axis with a
    # 2-row halo via manual make_async_copy (pl.ANY input) and re-derive the
    # tile budget for v7x's 64 MiB VMEM; whole-image blocks are fine here.
    out_nhwc = pl.pallas_call(
        kernel,
        out_shape=jax.ShapeDtypeStruct((N, H, W, Cout_p), jnp.float32),
        grid_spec=pltpu.PrefetchScalarGridSpec(
            num_scalar_prefetch=0,
            grid=(N, Cout_p // TCout),
            in_specs=[
                pl.BlockSpec((1, H, W, Cin), lambda n, j: (n, 0, 0, 0)),
                pl.BlockSpec((9 * Cin, TCout), lambda n, j: (0, j)),
                pl.BlockSpec((1, TCout), lambda n, j: (0, j)),
                pl.BlockSpec((1, TCout), lambda n, j: (0, j)),
            ],
            out_specs=pl.BlockSpec((1, H, W, TCout), lambda n, j: (n, 0, 0, j)),
        ),
        compiler_params=pltpu.CompilerParams(
            dimension_semantics=("parallel", "parallel"),
            vmem_limit_bytes=32 * 1024 * 1024,
        ),
    )(x_nhwc, w_mat, scale_p, bias_p)

    out_nhwc = out_nhwc[..., :Cout]                        # drop lane padding
    return jnp.transpose(out_nhwc, (0, 3, 1, 2))           # back to NCHW


def conv_block_reference(x, w, b, gamma, beta, rm, rv, eps=1e-5):
    """Plain-JAX reference (NCHW), using the same bf16 input/weight
    quantization as the kernel so the comparison isolates kernel errors."""
    xq = x.astype(jnp.bfloat16).astype(jnp.float32)
    wq = w.astype(jnp.bfloat16).astype(jnp.float32)
    y = lax.conv_general_dilated(
        xq, wq, window_strides=(1, 1), padding=((1, 1), (1, 1)),
        dimension_numbers=("NCHW", "OIHW", "NCHW"))
    y = y + b[None, :, None, None]
    y = ((y - rm[None, :, None, None])
         / jnp.sqrt(rv[None, :, None, None] + eps)
         * gamma[None, :, None, None] + beta[None, :, None, None])
    return jnp.maximum(y, 0.0)


if __name__ == "__main__":
    # Small, deterministic setup: batch=2, num_in=4, num_out=8, 16x16 spatial.
    N, Cin, Cout, H, W = 2, 4, 8, 16, 16
    key = jax.random.PRNGKey(0)
    kx, kw, kb, kg, kbe, km, kv = jax.random.split(key, 7)

    x = jax.random.normal(kx, (N, Cin, H, W), jnp.float32)
    w = jax.random.normal(kw, (Cout, Cin, 3, 3), jnp.float32) / jnp.sqrt(Cin * 9.0)
    b_conv = 0.1 * jax.random.normal(kb, (Cout,), jnp.float32)
    gamma = 1.0 + 0.1 * jax.random.normal(kg, (Cout,), jnp.float32)
    beta = 0.1 * jax.random.normal(kbe, (Cout,), jnp.float32)
    run_mean = 0.1 * jax.random.normal(km, (Cout,), jnp.float32)
    run_var = 1.0 + 0.1 * jax.random.uniform(kv, (Cout,), jnp.float32)

    out = conv_block_forward(x, w, b_conv, gamma, beta, run_mean, run_var)
    out = jax.block_until_ready(out)

    ref = conv_block_reference(x, w, b_conv, gamma, beta, run_mean, run_var)
    ref = jax.block_until_ready(ref)

    assert out.shape == (N, Cout, H, W)
    assert jnp.allclose(out, ref, atol=1e-3, rtol=1e-3), (
        f"max abs err {jnp.max(jnp.abs(out - ref))}")

    print("KERNEL_OK")
</pallas_src>

<mosaic_0001>
module attributes {stable_mosaic.version = 11 : i64} {
  func.func @_conv_block_kernel(%arg0: i32, %arg1: i32, %arg2: memref<1x16x16x4xbf16, #tpu.memory_space<vmem>>, %arg3: memref<36x128xbf16, #tpu.memory_space<vmem>>, %arg4: memref<1x128xf32, #tpu.memory_space<vmem>>, %arg5: memref<1x128xf32, #tpu.memory_space<vmem>>, %arg6: memref<1x16x16x128xf32, #tpu.memory_space<vmem>>) attributes {dimension_semantics = [#tpu.dimension_semantics<parallel>, #tpu.dimension_semantics<parallel>], iteration_bounds = array<i64: 2, 1>, scalar_prefetch = 0 : i64, scratch_operands = 0 : i64, tpu.core_type = #tpu.core_type<tc>, window_params = [{transform_indices = @transform_0, window_bounds = array<i64: 1, 16, 16, 4>}, {transform_indices = @transform_1, window_bounds = array<i64: 36, 128>}, {transform_indices = @transform_2, window_bounds = array<i64: 1, 128>}, {transform_indices = @transform_3, window_bounds = array<i64: 1, 128>}, {transform_indices = @transform_4, window_bounds = array<i64: 1, 16, 16, 128>}]} {
    %c0 = arith.constant 0 : index
    %c0_0 = arith.constant 0 : index
    %c0_1 = arith.constant 0 : index
    %c0_2 = arith.constant 0 : index
    %0 = vector.load %arg2[%c0, %c0_0, %c0_1, %c0_2] : memref<1x16x16x4xbf16, #tpu.memory_space<vmem>>, vector<1x16x16x4xbf16>
    %1 = vector.shape_cast %0 : vector<1x16x16x4xbf16> to vector<16x16x4xbf16>
    %2 = arith.extf %1 : vector<16x16x4xbf16> to vector<16x16x4xf32>
    %3 = tpu.iota {dimensions = array<i32: 1>} : vector<16x16x4xi32>
    %cst = arith.constant 0.000000e+00 : f32
    %4 = vector.broadcast %cst : f32 to vector<16x16x4xf32>
    %c1_i32 = arith.constant 1 : i32
    %5 = vector.broadcast %c1_i32 : i32 to vector<16x16x4xi32>
    %6 = arith.cmpi sge, %3, %5 : vector<16x16x4xi32>
    %c1_i32_3 = arith.constant 1 : i32
    %7 = tpu.dynamic_rotate %2 by %c1_i32_3 dim 1 : vector<16x16x4xf32>, i32 -> vector<16x16x4xf32>
    %8 = arith.select %6, %7, %4 : vector<16x16x4xi1>, vector<16x16x4xf32>
    %c14_i32 = arith.constant 14 : i32
    %9 = vector.broadcast %c14_i32 : i32 to vector<16x16x4xi32>
    %10 = arith.cmpi sle, %3, %9 : vector<16x16x4xi32>
    %c15_i32 = arith.constant 15 : i32
    %11 = tpu.dynamic_rotate %2 by %c15_i32 dim 1 : vector<16x16x4xf32>, i32 -> vector<16x16x4xf32>
    %12 = arith.select %10, %11, %4 : vector<16x16x4xi1>, vector<16x16x4xf32>
    %cst_4 = arith.constant 0.000000e+00 : f32
    %13 = vector.broadcast %cst_4 : f32 to vector<1x16x4xf32>
    %14 = tpu.concatenate %13, %8, %13 in 0 : vector<1x16x4xf32>, vector<16x16x4xf32>, vector<1x16x4xf32> -> vector<18x16x4xf32>
    %15 = tpu.concatenate %13, %2, %13 in 0 : vector<1x16x4xf32>, vector<16x16x4xf32>, vector<1x16x4xf32> -> vector<18x16x4xf32>
    %16 = tpu.concatenate %13, %12, %13 in 0 : vector<1x16x4xf32>, vector<16x16x4xf32>, vector<1x16x4xf32> -> vector<18x16x4xf32>
    %17 = vector.extract_strided_slice %14 {offsets = [0, 0, 0], sizes = [16, 16, 4], strides = [1, 1, 1]} : vector<18x16x4xf32> to vector<16x16x4xf32>
    %18 = vector.extract_strided_slice %15 {offsets = [0, 0, 0], sizes = [16, 16, 4], strides = [1, 1, 1]} : vector<18x16x4xf32> to vector<16x16x4xf32>
    %19 = vector.extract_strided_slice %16 {offsets = [0, 0, 0], sizes = [16, 16, 4], strides = [1, 1, 1]} : vector<18x16x4xf32> to vector<16x16x4xf32>
    %20 = vector.extract_strided_slice %14 {offsets = [1, 0, 0], sizes = [16, 16, 4], strides = [1, 1, 1]} : vector<18x16x4xf32> to vector<16x16x4xf32>
    %21 = vector.extract_strided_slice %15 {offsets = [1, 0, 0], sizes = [16, 16, 4], strides = [1, 1, 1]} : vector<18x16x4xf32> to vector<16x16x4xf32>
    %22 = vector.extract_strided_slice %16 {offsets = [1, 0, 0], sizes = [16, 16, 4], strides = [1, 1, 1]} : vector<18x16x4xf32> to vector<16x16x4xf32>
    %23 = vector.extract_strided_slice %14 {offsets = [2, 0, 0], sizes = [16, 16, 4], strides = [1, 1, 1]} : vector<18x16x4xf32> to vector<16x16x4xf32>
    %24 = vector.extract_strided_slice %15 {offsets = [2, 0, 0], sizes = [16, 16, 4], strides = [1, 1, 1]} : vector<18x16x4xf32> to vector<16x16x4xf32>
    %25 = vector.extract_strided_slice %16 {offsets = [2, 0, 0], sizes = [16, 16, 4], strides = [1, 1, 1]} : vector<18x16x4xf32> to vector<16x16x4xf32>
    %26 = tpu.concatenate %17, %18, %19, %20, %21, %22, %23, %24, %25 in 2 : vector<16x16x4xf32>, vector<16x16x4xf32>, vector<16x16x4xf32>, vector<16x16x4xf32>, vector<16x16x4xf32>, vector<16x16x4xf32>, vector<16x16x4xf32>, vector<16x16x4xf32>, vector<16x16x4xf32> -> vector<16x16x36xf32>
    %27 = vector.shape_cast %26 : vector<16x16x36xf32> to vector<256x36xf32>
    %28 = arith.truncf %27 : vector<256x36xf32> to vector<256x36xbf16>
    %c0_5 = arith.constant 0 : index
    %c0_6 = arith.constant 0 : index
    %29 = vector.load %arg3[%c0_5, %c0_6] : memref<36x128xbf16, #tpu.memory_space<vmem>>, vector<36x128xbf16>
    %cst_7 = arith.constant dense<0.000000e+00> : vector<256x128xf32>
    %30 = tpu.matmul %28, %29, %cst_7 {dimension_numbers = #tpu.dot_dimension_numbers<[1], [0], [0], [1], [0, 0, 1, 1], [], []>} : vector<256x36xbf16>, vector<36x128xbf16>, vector<256x128xf32> -> vector<256x128xf32>
    %c0_8 = arith.constant 0 : index
    %c0_9 = arith.constant 0 : index
    %31 = vector.load %arg4[%c0_8, %c0_9] : memref<1x128xf32, #tpu.memory_space<vmem>>, vector<1x128xf32>
    %32 = vector.broadcast %31 : vector<1x128xf32> to vector<256x128xf32>
    %33 = arith.mulf %30, %32 : vector<256x128xf32>
    %c0_10 = arith.constant 0 : index
    %c0_11 = arith.constant 0 : index
    %34 = vector.load %arg5[%c0_10, %c0_11] : memref<1x128xf32, #tpu.memory_space<vmem>>, vector<1x128xf32>
    %35 = vector.broadcast %34 : vector<1x128xf32> to vector<256x128xf32>
    %36 = arith.addf %33, %35 : vector<256x128xf32>
    %cst_12 = arith.constant 0.000000e+00 : f32
    %37 = vector.broadcast %cst_12 : f32 to vector<256x128xf32>
    %38 = arith.maximumf %36, %37 : vector<256x128xf32>
    %39 = vector.shape_cast %38 : vector<256x128xf32> to vector<16x16x128xf32>
    %c0_13 = arith.constant 0 : index
    %c0_14 = arith.constant 0 : index
    %c0_15 = arith.constant 0 : index
    %c0_16 = arith.constant 0 : index
    %40 = vector.load %arg6[%c0_13, %c0_14, %c0_15, %c0_16] : memref<1x16x16x128xf32, #tpu.memory_space<vmem>>, vector<1x16x16x128xf32>
    %41 = vector.shape_cast %40 : vector<1x16x16x128xf32> to vector<16x16x128xf32>
    %42 = vector.shape_cast %39 : vector<16x16x128xf32> to vector<1x16x16x128xf32>
    tpu.vector_store %arg6[%c0_13, %c0_14, %c0_15, %c0_16], %42 {strides = array<i32>} : memref<1x16x16x128xf32, #tpu.memory_space<vmem>>, vector<1x16x16x128xf32>,
    return
  }
  func.func @transform_0(%arg0: i32, %arg1: i32) -> (i32, i32, i32, i32) {
    %c0_i32 = arith.constant 0 : i32
    %c0_i32_0 = arith.constant 0 : i32
    %c0_i32_1 = arith.constant 0 : i32
    %c0_i32_2 = arith.constant 0 : i32
    return %arg0, %c0_i32, %c0_i32_0, %c0_i32_1 : i32, i32, i32, i32
  }
  func.func @transform_1(%arg0: i32, %arg1: i32) -> (i32, i32) {
    %c0_i32 = arith.constant 0 : i32
    %c0_i32_0 = arith.constant 0 : i32
    return %c0_i32, %arg1 : i32, i32
  }
  func.func @transform_2(%arg0: i32, %arg1: i32) -> (i32, i32) {
    %c0_i32 = arith.constant 0 : i32
    %c0_i32_0 = arith.constant 0 : i32
    return %c0_i32, %arg1 : i32, i32
  }
  func.func @transform_3(%arg0: i32, %arg1: i32) -> (i32, i32) {
    %c0_i32 = arith.constant 0 : i32
    %c0_i32_0 = arith.constant 0 : i32
    return %c0_i32, %arg1 : i32, i32
  }
  func.func @transform_4(%arg0: i32, %arg1: i32) -> (i32, i32, i32, i32) {
    %c0_i32 = arith.constant 0 : i32
    %c0_i32_0 = arith.constant 0 : i32
    %c0_i32_1 = arith.constant 0 : i32
    return %arg0, %c0_i32, %c0_i32_0, %arg1 : i32, i32, i32, i32
  }
}

</mosaic_0001>

<llo_original>
// kernel: tpu_custom_call.1
$region0: #{tpu_custom_call.1}
  #allocation0 [shape = 'u32[]', space=smem, size = 0x4, offset = 0x4, fixed_abs, tag = 'smem constant byte address 0x4 - core index']
  #allocation1 [shape = 'u32[144,128]{1,0:T(1,128)}', space=vmem, size = 0x12000, scoped, tag = 'internal scratch']
  %s0 = inlined_call_operand.vmem [shape: bf16[2,16,16,4], index: 0, kind: input, shape index: {}]
  %s1 = inlined_call_operand.vmem [shape: bf16[36,128], index: 1, kind: input, shape index: {}]
  %s2 = inlined_call_operand.vmem [shape: f32[1,128], index: 2, kind: input, shape index: {}]
  %s3 = inlined_call_operand.vmem [shape: f32[1,128], index: 3, kind: input, shape index: {}]
  %s4 = inlined_call_operand.hbm [shape: f32[2,16,16,128], index: 4, kind: output, shape index: {}]
  %s5 = sld [smem:[#allocation0]]
  $region49: #{tpu_custom_call.1} parent=0
    _
  %s7 = ssub.s32 1, %s5
  %s8 = scalar_select 0, %s7, %s5
  $region1: #{tpu_custom_call.1} parent=0
    #allocation2 [shape = 'u8[262144]{0}', space=vmem, size = 0x40000, scoped, tag = 'output window, operand 0']
    #allocation3 [shape = 's32[2]{0}', space=sflag, size = 0x8, scoped, tag = 'scoped memory for tpu_custom_call.1']
    %9 = vsyncpa [#allocation3], 0
    %s10 = scalar_lea.sflag [#allocation3], 1
    %11 = vsyncpa %s10, 0
    loop: start=0, step=1, limit=4
    $region2: #{tpu_custom_call.1} parent=1 // loop_pre_header
      _
    $region3: #{tpu_custom_call.1} parent=1 // loop_header
      %s13 = sphi 0, %s17
      %p14 = scmp.ge.s32.totalorder %s13, 4
      %s20 = sphi 0, %s32
      %s21 = sphi 0, %s28
      %s22 = sphi 0, %s20
      %s23 = sphi 0, %s21
      %s24 = sphi 0, %s22
      %s25 = sphi 0, %s23
      %s35 = sphi 0, %s37
      %s38 = sphi 0, %s35
      %s39 = sphi 0, %s38
      %s55 = sphi 0, %s39
      %s61 = sphi 0, %s63
      %s64 = sphi 0, %s61
      %s65 = sphi 0, %s64
      %s81 = sphi 0, %s65
      %s87 = sphi 0, %s89
      %s90 = sphi 0, %s87
      %s91 = sphi 0, %s90
      %s107 = sphi 0, %s91
      %s113 = sphi 0, %s115
      %s116 = sphi 0, %s113
      %s117 = sphi 0, %s116
      %s133 = sphi 0, %s117
      %s141 = sphi 0, %s143
      %s144 = sphi 0, %s141
      %s145 = sphi 0, %s144
      %s161 = sphi 0, %s145
    $region4: #{tpu_custom_call.1} parent=1 // loop_header_branch
      %16 = sbr.rel (%p14) target = $region8
    $region5: #{tpu_custom_call.1} parent=1 // loop_body
      %s18 = ssub.s32 %s13, 1
      %s19 = ssub.s32 %s13, 2
      %s26 = sadd.s32 1, %s21
      %p27 = scmp.ge.s32.totalorder %s26, 1
      %s28 = scalar_select %p27, 0, %s26
      %s29 = sadd.s32 1, %s20
      %s30 = scalar_select %p27, %s29, %s20
      %p31 = scmp.ge.s32.totalorder %s30, 2
      %s32 = scalar_select %p31, 0, %s30
      %s33 = ssub.s32 %s20, %s32
      %p34 = scmp.eq.s32.totalorder %s33, 0
      %s36 = sadd.s32 %s35, 1
      %s37 = scalar_select %p34, %s35, %s36
      %p40 = pneg %p34
      %p41 = scmp.eq.s32.totalorder %s13, 1
      %p42 = por %p40, %p41
      %p43 = scmp.ne.s32.totalorder %s35, %s38
      %p44 = scmp.eq.s32.totalorder %s13, 0
      %p45 = por %p43, %p44
      %p46 = scmp.ne.s32.totalorder %s35, %s38
      %p47 = scmp.eq.s32.totalorder %s18, 1
      %p48 = por %p46, %p47
      %p49 = scmp.ne.s32.totalorder %s38, %s39
      %p50 = scmp.eq.s32.totalorder %s18, 0
      %p51 = por %p49, %p50
      %p52 = scmp.ne.s32.totalorder %s38, %s39
      %p53 = scmp.eq.s32.totalorder %s19, 1
      %p54 = por %p52, %p53
      %p56 = scmp.ne.s32.totalorder %s39, %s55
      %p57 = scmp.eq.s32.totalorder %s19, 0
      %p58 = por %p56, %p57
      %s59 = ssub.s32 %s21, %s28
      %p60 = scmp.eq.s32.totalorder %s59, 0
      %s62 = sadd.s32 %s61, 1
      %s63 = scalar_select %p60, %s61, %s62
      %p66 = pneg %p60
      %p67 = scmp.eq.s32.totalorder %s13, 1
      %p68 = por %p66, %p67
      %p69 = scmp.ne.s32.totalorder %s61, %s64
      %p70 = scmp.eq.s32.totalorder %s13, 0
      %p71 = por %p69, %p70
      %p72 = scmp.ne.s32.totalorder %s61, %s64
      %p73 = scmp.eq.s32.totalorder %s18, 1
      %p74 = por %p72, %p73
      %p75 = scmp.ne.s32.totalorder %s64, %s65
      %p76 = scmp.eq.s32.totalorder %s18, 0
      %p77 = por %p75, %p76
      %p78 = scmp.ne.s32.totalorder %s64, %s65
      %p79 = scmp.eq.s32.totalorder %s19, 1
      %p80 = por %p78, %p79
      %p82 = scmp.ne.s32.totalorder %s65, %s81
      %p83 = scmp.eq.s32.totalorder %s19, 0
      %p84 = por %p82, %p83
      %s85 = ssub.s32 %s21, %s28
      %p86 = scmp.eq.s32.totalorder %s85, 0
      %s88 = sadd.s32 %s87, 1
      %s89 = scalar_select %p86, %s87, %s88
      %p92 = pneg %p86
      %p93 = scmp.eq.s32.totalorder %s13, 1
      %p94 = por %p92, %p93
      %p95 = scmp.ne.s32.totalorder %s87, %s90
      %p96 = scmp.eq.s32.totalorder %s13, 0
      %p97 = por %p95, %p96
      %p98 = scmp.ne.s32.totalorder %s87, %s90
      %p99 = scmp.eq.s32.totalorder %s18, 1
      %p100 = por %p98, %p99
      %p101 = scmp.ne.s32.totalorder %s90, %s91
      %p102 = scmp.eq.s32.totalorder %s18, 0
      %p103 = por %p101, %p102
      %p104 = scmp.ne.s32.totalorder %s90, %s91
      %p105 = scmp.eq.s32.totalorder %s19, 1
      %p106 = por %p104, %p105
      %p108 = scmp.ne.s32.totalorder %s91, %s107
      %p109 = scmp.eq.s32.totalorder %s19, 0
      %p110 = por %p108, %p109
      %s111 = ssub.s32 %s21, %s28
      %p112 = scmp.eq.s32.totalorder %s111, 0
      %s114 = sadd.s32 %s113, 1
      %s115 = scalar_select %p112, %s113, %s114
      %p118 = pneg %p112
      %p119 = scmp.eq.s32.totalorder %s13, 1
      %p120 = por %p118, %p119
      %p121 = scmp.ne.s32.totalorder %s113, %s116
      %p122 = scmp.eq.s32.totalorder %s13, 0
      %p123 = por %p121, %p122
      %p124 = scmp.ne.s32.totalorder %s113, %s116
      %p125 = scmp.eq.s32.totalorder %s18, 1
      %p126 = por %p124, %p125
      %p127 = scmp.ne.s32.totalorder %s116, %s117
      %p128 = scmp.eq.s32.totalorder %s18, 0
      %p129 = por %p127, %p128
      %p130 = scmp.ne.s32.totalorder %s116, %s117
      %p131 = scmp.eq.s32.totalorder %s19, 1
      %p132 = por %p130, %p131
      %p134 = scmp.ne.s32.totalorder %s117, %s133
      %p135 = scmp.eq.s32.totalorder %s19, 0
      %p136 = por %p134, %p135
      %s137 = ssub.s32 %s20, %s32
      %s138 = ssub.s32 %s21, %s28
      %s139 = sor.u32 %s137, %s138
      %p140 = scmp.eq.s32.totalorder %s139, 0
      %s142 = sadd.s32 %s141, 1
      %s143 = scalar_select %p140, %s141, %s142
      %p146 = pneg %p140
      %p147 = scmp.eq.s32.totalorder %s13, 1
      %p148 = por %p146, %p147
      %p149 = scmp.ne.s32.totalorder %s141, %s144
      %p150 = scmp.eq.s32.totalorder %s13, 0
      %p151 = por %p149, %p150
      %p152 = scmp.ne.s32.totalorder %s141, %s144
      %p153 = scmp.eq.s32.totalorder %s18, 1
      %p154 = por %p152, %p153
      %p155 = scmp.ne.s32.totalorder %s144, %s145
      %p156 = scmp.eq.s32.totalorder %s18, 0
      %p157 = por %p155, %p156
      %p158 = scmp.ne.s32.totalorder %s144, %s145
      %p159 = scmp.eq.s32.totalorder %s19, 1
      %p160 = por %p158, %p159
      %p162 = scmp.ne.s32.totalorder %s145, %s161
      %p163 = scmp.eq.s32.totalorder %s19, 0
      %p164 = por %p162, %p163
      %p165 = scmp.le.s32.totalorder 1, %s13
      %p166 = scmp.lt.s32.totalorder %s13, 3
      %p167 = pnand %p165, %p166
      %p168 = pneg %p167
      // Predicated region
      $region9: #{tpu_custom_call.1} parent=5 // pred_check
        _
      $region10: #{tpu_custom_call.1} parent=5 // pred_check_branch
        %170 = sbr.rel (%p167) target = $region12
      $region11: #{tpu_custom_call.1} parent=5 // pred_region
        %s171 = ssub.s32 %s13, 1
        // Predicated region
        $region13: #{tpu_custom_call.1} parent=11 // pred_check
          %p172 = pneg %p77
        $region14: #{tpu_custom_call.1} parent=11 // pred_check_branch
          %174 = sbr.rel (%p172) target = $region16
        $region15: #{tpu_custom_call.1} parent=11 // pred_region
          %p175 = scmp.lt.s32.totalorder %s23, 0
          %s176 = scalar_select %p175, %s23, 0
          %s177 = smul.addr %s176, 4
          %s178 = scalar_lea.vmem %s1, %s177
        $region16: #{tpu_custom_call.1} parent=11 // pred_fallthru
          _
        // Predicated region
        $region17: #{tpu_custom_call.1} parent=11 // pred_check
          %p179 = pneg %p103
        $region18: #{tpu_custom_call.1} parent=11 // pred_check_branch
          %181 = sbr.rel (%p179) target = $region20
        $region19: #{tpu_custom_call.1} parent=11 // pred_region
          %p182 = scmp.lt.s32.totalorder %s23, 0
          %s183 = scalar_select %p182, %s23, 0
          %s184 = scalar_lea.vmem %s2, %s183
        $region20: #{tpu_custom_call.1} parent=11 // pred_fallthru
          _
        // Predicated region
        $region21: #{tpu_custom_call.1} parent=11 // pred_check
          %p185 = pneg %p129
        $region22: #{tpu_custom_call.1} parent=11 // pred_check_branch
          %187 = sbr.rel (%p185) target = $region24
        $region23: #{tpu_custom_call.1} parent=11 // pred_region
          %p188 = scmp.lt.s32.totalorder %s23, 0
          %s189 = scalar_select %p188, %s23, 0
          %s190 = scalar_lea.vmem %s3, %s189
        $region24: #{tpu_custom_call.1} parent=11 // pred_fallthru
          _
      $region12: #{tpu_custom_call.1} parent=5 // pred_fallthru
        _
      %p191 = scmp.lt.s32.totalorder %s13, 2
      // Predicated region
      $region25: #{tpu_custom_call.1} parent=5 // pred_check
        %p192 = pneg %p191
      $region26: #{tpu_custom_call.1} parent=5 // pred_check_branch
        %194 = sbr.rel (%p192) target = $region28
      $region27: #{tpu_custom_call.1} parent=5 // pred_region
        // Predicated region
        $region29: #{tpu_custom_call.1} parent=27 // pred_check
          %p195 = pneg %p45
        $region30: #{tpu_custom_call.1} parent=27 // pred_check_branch
          %197 = sbr.rel (%p195) target = $region32
        $region31: #{tpu_custom_call.1} parent=27 // pred_region
          %p198 = scmp.lt.s32.totalorder %s20, 1
          %s199 = scalar_select %p198, %s20, 1
          %s200 = smul.addr %s199, 32
          %s201 = smul.addr %s200, 4
          %s202 = scalar_lea.vmem %s0, %s201
        $region32: #{tpu_custom_call.1} parent=27 // pred_fallthru
          _
      $region28: #{tpu_custom_call.1} parent=5 // pred_fallthru
        _
      %p203 = scmp.le.s32.totalorder 1, %s13
      %p204 = scmp.lt.s32.totalorder %s13, 3
      %p205 = pnand %p203, %p204
      %p206 = pneg %p205
      // Predicated region
      $region33: #{tpu_custom_call.1} parent=5 // pred_check
        _
      $region34: #{tpu_custom_call.1} parent=5 // pred_check_branch
        %208 = sbr.rel (%p205) target = $region36
      $region35: #{tpu_custom_call.1} parent=5 // pred_region
        %s209 = ssub.s32 %s13, 1
        %p210 = scmp.lt.s32.totalorder %s22, 1
        %s211 = scalar_select %p210, %s22, 1
        %s212 = smul.addr %s211, 32
        %s213 = smul.addr %s212, 4
        %s214 = scalar_lea.vmem %s0, %s213
        %p215 = pneg %p51
        %p216 = pneg %p48
        %p217 = scmp.lt.s32.totalorder %s23, 0
        %s218 = scalar_select %p217, %s23, 0
        %s219 = smul.addr %s218, 4
        %s220 = scalar_lea.vmem %s1, %s219
        %p221 = pneg %p77
        %p222 = pneg %p74
        %p223 = scmp.lt.s32.totalorder %s23, 0
        %s224 = scalar_select %p223, %s23, 0
        %s225 = scalar_lea.vmem %s2, %s224
        %p226 = pneg %p103
        %p227 = pneg %p100
        %p228 = scmp.lt.s32.totalorder %s23, 0
        %s229 = scalar_select %p228, %s23, 0
        %s230 = scalar_lea.vmem %s3, %s229
        %p231 = pneg %p129
        %p232 = pneg %p126
        %p233 = pneg %p157
        %p234 = pneg %p154
        %s235 = sand.u32 %s144, 1
        %s236 = scalar_lea.sflag [#allocation3], %s235
        %s237 = sand.u32 %s144, 1
        %s238 = smul.addr %s237, 256
        %s239 = scalar_lea.vmem [#allocation2], %s238
        %p240 = scmp.lt.s32.totalorder %s22, 1
        %s241 = scalar_select %p240, %s22, 1
        %s242 = smul.addr %s241, 32
        %s243 = smul.addr %s242, 4
        %s244 = scalar_lea.vmem %s0, %s243
        %p245 = scmp.lt.s32.totalorder %s23, 0
        %s246 = scalar_select %p245, %s23, 0
        %s247 = smul.addr %s246, 4
        %s248 = scalar_lea.vmem %s1, %s247
        %p249 = scmp.lt.s32.totalorder %s23, 0
        %s250 = scalar_select %p249, %s23, 0
        %s251 = scalar_lea.vmem %s2, %s250
        %p252 = scmp.lt.s32.totalorder %s23, 0
        %s253 = scalar_select %p252, %s23, 0
        %s254 = scalar_lea.vmem %s3, %s253
        %v256 = vld [vmem:[%s244] sm:$0xf]
        %v257 = vld [vmem:[%s244 + $0x4] sm:$0xf]
        %v258 = vld [vmem:[%s244 + $0x8] sm:$0xf]
        %v259 = vld [vmem:[%s244 + $0xc] sm:$0xf]
        %v260 = vld [vmem:[%s244 + $0x10] sm:$0xf]
        %v261 = vld [vmem:[%s244 + $0x14] sm:$0xf]
        %v262 = vld [vmem:[%s244 + $0x18] sm:$0xf]
        %v263 = vld [vmem:[%s244 + $0x1c] sm:$0xf]
        %v264 = vld [vmem:[%s244 + $0x20] sm:$0xf]
        %v265 = vld [vmem:[%s244 + $0x24] sm:$0xf]
        %v266 = vld [vmem:[%s244 + $0x28] sm:$0xf]
        %v267 = vld [vmem:[%s244 + $0x2c] sm:$0xf]
        %v268 = vld [vmem:[%s244 + $0x30] sm:$0xf]
        %v269 = vld [vmem:[%s244 + $0x34] sm:$0xf]
        %v270 = vld [vmem:[%s244 + $0x38] sm:$0xf]
        %v271 = vld [vmem:[%s244 + $0x3c] sm:$0xf]
        %v272 = vld [vmem:[%s244 + $0x40] sm:$0xf]
        %v273 = vld [vmem:[%s244 + $0x44] sm:$0xf]
        %v274 = vld [vmem:[%s244 + $0x48] sm:$0xf]
        %v275 = vld [vmem:[%s244 + $0x4c] sm:$0xf]
        %v276 = vld [vmem:[%s244 + $0x50] sm:$0xf]
        %v277 = vld [vmem:[%s244 + $0x54] sm:$0xf]
        %v278 = vld [vmem:[%s244 + $0x58] sm:$0xf]
        %v279 = vld [vmem:[%s244 + $0x5c] sm:$0xf]
        %v280 = vld [vmem:[%s244 + $0x60] sm:$0xf]
        %v281 = vld [vmem:[%s244 + $0x64] sm:$0xf]
        %v282 = vld [vmem:[%s244 + $0x68] sm:$0xf]
        %v283 = vld [vmem:[%s244 + $0x6c] sm:$0xf]
        %v284 = vld [vmem:[%s244 + $0x70] sm:$0xf]
        %v285 = vld [vmem:[%s244 + $0x74] sm:$0xf]
        %v286 = vld [vmem:[%s244 + $0x78] sm:$0xf]
        %v287 = vld [vmem:[%s244 + $0x7c] sm:$0xf]
        %v288 = vunpack.c.l.bf16 %v256
        %v289 = vunpack.c.l.bf16 %v257
        %v290 = vunpack.c.l.bf16 %v258
        %v291 = vunpack.c.l.bf16 %v259
        %v292 = vunpack.c.l.bf16 %v260
        %v293 = vunpack.c.l.bf16 %v261
        %v294 = vunpack.c.l.bf16 %v262
        %v295 = vunpack.c.l.bf16 %v263
        %v296 = vunpack.c.l.bf16 %v264
        %v297 = vunpack.c.l.bf16 %v265
        %v298 = vunpack.c.l.bf16 %v266
        %v299 = vunpack.c.l.bf16 %v267
        %v300 = vunpack.c.l.bf16 %v268
        %v301 = vunpack.c.l.bf16 %v269
        %v302 = vunpack.c.l.bf16 %v270
        %v303 = vunpack.c.l.bf16 %v271
        %v304 = vunpack.c.l.bf16 %v272
        %v305 = vunpack.c.l.bf16 %v273
        %v306 = vunpack.c.l.bf16 %v274
        %v307 = vunpack.c.l.bf16 %v275
        %v308 = vunpack.c.l.bf16 %v276
        %v309 = vunpack.c.l.bf16 %v277
        %v310 = vunpack.c.l.bf16 %v278
        %v311 = vunpack.c.l.bf16 %v279
        %v312 = vunpack.c.l.bf16 %v280
        %v313 = vunpack.c.l.bf16 %v281
        %v314 = vunpack.c.l.bf16 %v282
        %v315 = vunpack.c.l.bf16 %v283
        %v316 = vunpack.c.l.bf16 %v284
        %v317 = vunpack.c.l.bf16 %v285
        %v318 = vunpack.c.l.bf16 %v286
        %v319 = vunpack.c.l.bf16 %v287
        %v320 = vlaneseq
        %v321 = vshrl.u32 %v320, 7
        %v322 = vadd.s32 %v321, 8
        %vm323 = vcmp.ge.s32.totalorder %v321, 1
        %vm324 = vcmp.ge.s32.totalorder %v322, 1
        %v325 = vrot.slane %v288, 7
        %v326 = vrot.slane %v290, 7
        %v327 = vrot.slane %v292, 7
        %v328 = vrot.slane %v294, 7
        %v329 = vrot.slane %v296, 7
        %v330 = vrot.slane %v298, 7
        %v331 = vrot.slane %v300, 7
        %v332 = vrot.slane %v302, 7
        %v333 = vrot.slane %v304, 7
        %v334 = vrot.slane %v306, 7
        %v335 = vrot.slane %v308, 7
        %v336 = vrot.slane %v310, 7
        %v337 = vrot.slane %v312, 7
        %v338 = vrot.slane %v314, 7
        %v339 = vrot.slane %v316, 7
        %v340 = vrot.slane %v318, 7
        %v341 = vrot.slane %v289, 7
        %v342 = vrot.slane %v291, 7
        %v343 = vrot.slane %v293, 7
        %v344 = vrot.slane %v295, 7
        %v345 = vrot.slane %v297, 7
        %v346 = vrot.slane %v299, 7
        %v347 = vrot.slane %v301, 7
        %v348 = vrot.slane %v303, 7
        %v349 = vrot.slane %v305, 7
        %v350 = vrot.slane %v307, 7
        %v351 = vrot.slane %v309, 7
        %v352 = vrot.slane %v311, 7
        %v353 = vrot.slane %v313, 7
        %v354 = vrot.slane %v315, 7
        %v355 = vrot.slane %v317, 7
        %v356 = vrot.slane %v319, 7
        %vm357 = vcmp.lt.s32.totalorder %v321, 1
        %v358 = vsel %vm357, %v325, %v341
        %v359 = vsel %vm357, %v326, %v342
        %v360 = vsel %vm357, %v327, %v343
        %v361 = vsel %vm357, %v328, %v344
        %v362 = vsel %vm357, %v329, %v345
        %v363 = vsel %vm357, %v330, %v346
        %v364 = vsel %vm357, %v331, %v347
        %v365 = vsel %vm357, %v332, %v348
        %v366 = vsel %vm357, %v333, %v349
        %v367 = vsel %vm357, %v334, %v350
        %v368 = vsel %vm357, %v335, %v351
        %v369 = vsel %vm357, %v336, %v352
        %v370 = vsel %vm357, %v337, %v353
        %v371 = vsel %vm357, %v338, %v354
        %v372 = vsel %vm357, %v339, %v355
        %v373 = vsel %vm357, %v340, %v356
        %v374 = vsel %vm357, %v341, %v325
        %v375 = vsel %vm357, %v342, %v326
        %v376 = vsel %vm357, %v343, %v327
        %v377 = vsel %vm357, %v344, %v328
        %v378 = vsel %vm357, %v345, %v329
        %v379 = vsel %vm357, %v346, %v330
        %v380 = vsel %vm357, %v347, %v331
        %v381 = vsel %vm357, %v348, %v332
        %v382 = vsel %vm357, %v349, %v333
        %v383 = vsel %vm357, %v350, %v334
        %v384 = vsel %vm357, %v351, %v335
        %v385 = vsel %vm357, %v352, %v336
        %v386 = vsel %vm357, %v353, %v337
        %v387 = vsel %vm357, %v354, %v338
        %v388 = vsel %vm357, %v355, %v339
        %v389 = vsel %vm357, %v356, %v340
        %v390 = vsel %vm323, %v374, 0.0
        %v391 = vsel %vm324, %v358, 0.0
        %v392 = vsel %vm323, %v375, 0.0
        %v393 = vsel %vm324, %v359, 0.0
        %v394 = vsel %vm323, %v376, 0.0
        %v395 = vsel %vm324, %v360, 0.0
        %v396 = vsel %vm323, %v377, 0.0
        %v397 = vsel %vm324, %v361, 0.0
        %v398 = vsel %vm323, %v378, 0.0
        %v399 = vsel %vm324, %v362, 0.0
        %v400 = vsel %vm323, %v379, 0.0
        %v401 = vsel %vm324, %v363, 0.0
        %v402 = vsel %vm323, %v380, 0.0
        %v403 = vsel %vm324, %v364, 0.0
        %v404 = vsel %vm323, %v381, 0.0
        %v405 = vsel %vm324, %v365, 0.0
        %v406 = vsel %vm323, %v382, 0.0
        %v407 = vsel %vm324, %v366, 0.0
        %v408 = vsel %vm323, %v383, 0.0
        %v409 = vsel %vm324, %v367, 0.0
        %v410 = vsel %vm323, %v384, 0.0
        %v411 = vsel %vm324, %v368, 0.0
        %v412 = vsel %vm323, %v385, 0.0
        %v413 = vsel %vm324, %v369, 0.0
        %v414 = vsel %vm323, %v386, 0.0
        %v415 = vsel %vm324, %v370, 0.0
        %v416 = vsel %vm323, %v387, 0.0
        %v417 = vsel %vm324, %v371, 0.0
        %v418 = vsel %vm323, %v388, 0.0
        %v419 = vsel %vm324, %v372, 0.0
        %v420 = vsel %vm323, %v389, 0.0
        %v421 = vsel %vm324, %v373, 0.0
        %vm422 = vcmp.le.s32.totalorder %v321, 14
        %vm423 = vcmp.le.s32.totalorder %v322, 14
        %v424 = vrot.slane %v288, 1
        %v425 = vrot.slane %v290, 1
        %v426 = vrot.slane %v292, 1
        %v427 = vrot.slane %v294, 1
        %v428 = vrot.slane %v296, 1
        %v429 = vrot.slane %v298, 1
        %v430 = vrot.slane %v300, 1
        %v431 = vrot.slane %v302, 1
        %v432 = vrot.slane %v304, 1
        %v433 = vrot.slane %v306, 1
        %v434 = vrot.slane %v308, 1
        %v435 = vrot.slane %v310, 1
        %v436 = vrot.slane %v312, 1
        %v437 = vrot.slane %v314, 1
        %v438 = vrot.slane %v316, 1
        %v439 = vrot.slane %v318, 1
        %v440 = vrot.slane %v289, 1
        %v441 = vrot.slane %v291, 1
        %v442 = vrot.slane %v293, 1
        %v443 = vrot.slane %v295, 1
        %v444 = vrot.slane %v297, 1
        %v445 = vrot.slane %v299, 1
        %v446 = vrot.slane %v301, 1
        %v447 = vrot.slane %v303, 1
        %v448 = vrot.slane %v305, 1
        %v449 = vrot.slane %v307, 1
        %v450 = vrot.slane %v309, 1
        %v451 = vrot.slane %v311, 1
        %v452 = vrot.slane %v313, 1
        %v453 = vrot.slane %v315, 1
        %v454 = vrot.slane %v317, 1
        %v455 = vrot.slane %v319, 1
        %vm456 = vcmp.lt.s32.totalorder %v321, 7
        %v457 = vsel %vm456, %v424, %v440
        %v458 = vsel %vm456, %v425, %v441
        %v459 = vsel %vm456, %v426, %v442
        %v460 = vsel %vm456, %v427, %v443
        %v461 = vsel %vm456, %v428, %v444
        %v462 = vsel %vm456, %v429, %v445
        %v463 = vsel %vm456, %v430, %v446
        %v464 = vsel %vm456, %v431, %v447
        %v465 = vsel %vm456, %v432, %v448
        %v466 = vsel %vm456, %v433, %v449
        %v467 = vsel %vm456, %v434, %v450
        %v468 = vsel %vm456, %v435, %v451
        %v469 = vsel %vm456, %v436, %v452
        %v470 = vsel %vm456, %v437, %v453
        %v471 = vsel %vm456, %v438, %v454
        %v472 = vsel %vm456, %v439, %v455
        %v473 = vsel %vm456, %v440, %v424
        %v474 = vsel %vm456, %v441, %v425
        %v475 = vsel %vm456, %v442, %v426
        %v476 = vsel %vm456, %v443, %v427
        %v477 = vsel %vm456, %v444, %v428
        %v478 = vsel %vm456, %v445, %v429
        %v479 = vsel %vm456, %v446, %v430
        %v480 = vsel %vm456, %v447, %v431
        %v481 = vsel %vm456, %v448, %v432
        %v482 = vsel %vm456, %v449, %v433
        %v483 = vsel %vm456, %v450, %v434
        %v484 = vsel %vm456, %v451, %v435
        %v485 = vsel %vm456, %v452, %v436
        %v486 = vsel %vm456, %v453, %v437
        %v487 = vsel %vm456, %v454, %v438
        %v488 = vsel %vm456, %v455, %v439
        %v489 = vsel %vm422, %v457, 0.0
        %v490 = vsel %vm423, %v473, 0.0
        %v491 = vsel %vm422, %v458, 0.0
        %v492 = vsel %vm423, %v474, 0.0
        %v493 = vsel %vm422, %v459, 0.0
        %v494 = vsel %vm423, %v475, 0.0
        %v495 = vsel %vm422, %v460, 0.0
        %v496 = vsel %vm423, %v476, 0.0
        %v497 = vsel %vm422, %v461, 0.0
        %v498 = vsel %vm423, %v477, 0.0
        %v499 = vsel %vm422, %v462, 0.0
        %v500 = vsel %vm423, %v478, 0.0
        %v501 = vsel %vm422, %v463, 0.0
        %v502 = vsel %vm423, %v479, 0.0
        %v503 = vsel %vm422, %v464, 0.0
        %v504 = vsel %vm423, %v480, 0.0
        %v505 = vsel %vm422, %v465, 0.0
        %v506 = vsel %vm423, %v481, 0.0
        %v507 = vsel %vm422, %v466, 0.0
        %v508 = vsel %vm423, %v482, 0.0
        %v509 = vsel %vm422, %v467, 0.0
        %v510 = vsel %vm423, %v483, 0.0
        %v511 = vsel %vm422, %v468, 0.0
        %v512 = vsel %vm423, %v484, 0.0
        %v513 = vsel %vm422, %v469, 0.0
        %v514 = vsel %vm423, %v485, 0.0
        %v515 = vsel %vm422, %v470, 0.0
        %v516 = vsel %vm423, %v486, 0.0
        %v517 = vsel %vm422, %v471, 0.0
        %v518 = vsel %vm423, %v487, 0.0
        %v519 = vsel %vm422, %v472, 0.0
        %v520 = vsel %vm423, %v488, 0.0
        %552 = vrot.lane.b32.xlu0 0.0, 4
        %v553 = vpop.permute.xlu0 %552
        %554 = vrot.lane.b32.xlu0 %v288, 4
        %v555 = vpop.permute.xlu0 %554
        %556 = vrot.lane.b32.xlu0 %v289, 4
        %v557 = vpop.permute.xlu0 %556
        %558 = vrot.lane.b32.xlu0 %v290, 4
        %v559 = vpop.permute.xlu0 %558
        %560 = vrot.lane.b32.xlu0 %v291, 4
        %v561 = vpop.permute.xlu0 %560
        %562 = vrot.lane.b32.xlu0 %v292, 4
        %v563 = vpop.permute.xlu0 %562
        %564 = vrot.lane.b32.xlu0 %v293, 4
        %v565 = vpop.permute.xlu0 %564
        %566 = vrot.lane.b32.xlu0 %v294, 4
        %v567 = vpop.permute.xlu0 %566
        %568 = vrot.lane.b32.xlu0 %v295, 4
        %v569 = vpop.permute.xlu0 %568
        %570 = vrot.lane.b32.xlu0 %v296, 4
        %v571 = vpop.permute.xlu0 %570
        %572 = vrot.lane.b32.xlu0 %v297, 4
        %v573 = vpop.permute.xlu0 %572
        %574 = vrot.lane.b32.xlu0 %v298, 4
        %v575 = vpop.permute.xlu0 %574
        %576 = vrot.lane.b32.xlu0 %v299, 4
        %v577 = vpop.permute.xlu0 %576
        %578 = vrot.lane.b32.xlu0 %v300, 4
        %v579 = vpop.permute.xlu0 %578
        %580 = vrot.lane.b32.xlu0 %v301, 4
        %v581 = vpop.permute.xlu0 %580
        %582 = vrot.lane.b32.xlu0 %v302, 4
        %v583 = vpop.permute.xlu0 %582
        %584 = vrot.lane.b32.xlu0 %v303, 4
        %v585 = vpop.permute.xlu0 %584
        %586 = vrot.lane.b32.xlu0 %v304, 4
        %v587 = vpop.permute.xlu0 %586
        %588 = vrot.lane.b32.xlu0 %v305, 4
        %v589 = vpop.permute.xlu0 %588
        %590 = vrot.lane.b32.xlu0 %v306, 4
        %v591 = vpop.permute.xlu0 %590
        %592 = vrot.lane.b32.xlu0 %v307, 4
        %v593 = vpop.permute.xlu0 %592
        %594 = vrot.lane.b32.xlu0 %v308, 4
        %v595 = vpop.permute.xlu0 %594
        %596 = vrot.lane.b32.xlu0 %v309, 4
        %v597 = vpop.permute.xlu0 %596
        %598 = vrot.lane.b32.xlu0 %v310, 4
        %v599 = vpop.permute.xlu0 %598
        %600 = vrot.lane.b32.xlu0 %v311, 4
        %v601 = vpop.permute.xlu0 %600
        %602 = vrot.lane.b32.xlu0 %v312, 4
        %v603 = vpop.permute.xlu0 %602
        %604 = vrot.lane.b32.xlu0 %v313, 4
        %v605 = vpop.permute.xlu0 %604
        %606 = vrot.lane.b32.xlu0 %v314, 4
        %v607 = vpop.permute.xlu0 %606
        %608 = vrot.lane.b32.xlu0 %v315, 4
        %v609 = vpop.permute.xlu0 %608
        %610 = vrot.lane.b32.xlu0 %v316, 4
        %v611 = vpop.permute.xlu0 %610
        %612 = vrot.lane.b32.xlu0 %v317, 4
        %v613 = vpop.permute.xlu0 %612
        %675 = vrot.lane.b32.xlu0 0.0, 8
        %v676 = vpop.permute.xlu0 %675
        %677 = vrot.lane.b32.xlu0 %v489, 8
        %v678 = vpop.permute.xlu0 %677
        %679 = vrot.lane.b32.xlu0 %v490, 8
        %v680 = vpop.permute.xlu0 %679
        %681 = vrot.lane.b32.xlu0 %v491, 8
        %v682 = vpop.permute.xlu0 %681
        %683 = vrot.lane.b32.xlu0 %v492, 8
        %v684 = vpop.permute.xlu0 %683
        %685 = vrot.lane.b32.xlu0 %v493, 8
        %v686 = vpop.permute.xlu0 %685
        %687 = vrot.lane.b32.xlu0 %v494, 8
        %v688 = vpop.permute.xlu0 %687
        %689 = vrot.lane.b32.xlu0 %v495, 8
        %v690 = vpop.permute.xlu0 %689
        %691 = vrot.lane.b32.xlu0 %v496, 8
        %v692 = vpop.permute.xlu0 %691
        %693 = vrot.lane.b32.xlu0 %v497, 8
        %v694 = vpop.permute.xlu0 %693
        %695 = vrot.lane.b32.xlu0 %v498, 8
        %v696 = vpop.permute.xlu0 %695
        %697 = vrot.lane.b32.xlu0 %v499, 8
        %v698 = vpop.permute.xlu0 %697
        %699 = vrot.lane.b32.xlu0 %v500, 8
        %v700 = vpop.permute.xlu0 %699
        %701 = vrot.lane.b32.xlu0 %v501, 8
        %v702 = vpop.permute.xlu0 %701
        %703 = vrot.lane.b32.xlu0 %v502, 8
        %v704 = vpop.permute.xlu0 %703
        %705 = vrot.lane.b32.xlu0 %v503, 8
        %v706 = vpop.permute.xlu0 %705
        %707 = vrot.lane.b32.xlu0 %v504, 8
        %v708 = vpop.permute.xlu0 %707
        %709 = vrot.lane.b32.xlu0 %v505, 8
        %v710 = vpop.permute.xlu0 %709
        %711 = vrot.lane.b32.xlu0 %v506, 8
        %v712 = vpop.permute.xlu0 %711
        %713 = vrot.lane.b32.xlu0 %v507, 8
        %v714 = vpop.permute.xlu0 %713
        %715 = vrot.lane.b32.xlu0 %v508, 8
        %v716 = vpop.permute.xlu0 %715
        %717 = vrot.lane.b32.xlu0 %v509, 8
        %v718 = vpop.permute.xlu0 %717
        %719 = vrot.lane.b32.xlu0 %v510, 8
        %v720 = vpop.permute.xlu0 %719
        %721 = vrot.lane.b32.xlu0 %v511, 8
        %v722 = vpop.permute.xlu0 %721
        %723 = vrot.lane.b32.xlu0 %v512, 8
        %v724 = vpop.permute.xlu0 %723
        %725 = vrot.lane.b32.xlu0 %v513, 8
        %v726 = vpop.permute.xlu0 %725
        %727 = vrot.lane.b32.xlu0 %v514, 8
        %v728 = vpop.permute.xlu0 %727
        %729 = vrot.lane.b32.xlu0 %v515, 8
        %v730 = vpop.permute.xlu0 %729
        %731 = vrot.lane.b32.xlu0 %v516, 8
        %v732 = vpop.permute.xlu0 %731
        %733 = vrot.lane.b32.xlu0 %v517, 8
        %v734 = vpop.permute.xlu0 %733
        %735 = vrot.lane.b32.xlu0 %v518, 8
        %v736 = vpop.permute.xlu0 %735
        %800 = vrot.lane.b32.xlu0 %v390, 12
        %v801 = vpop.permute.xlu0 %800
        %802 = vrot.lane.b32.xlu0 %v391, 12
        %v803 = vpop.permute.xlu0 %802
        %804 = vrot.lane.b32.xlu0 %v392, 12
        %v805 = vpop.permute.xlu0 %804
        %806 = vrot.lane.b32.xlu0 %v393, 12
        %v807 = vpop.permute.xlu0 %806
        %808 = vrot.lane.b32.xlu0 %v394, 12
        %v809 = vpop.permute.xlu0 %808
        %810 = vrot.lane.b32.xlu0 %v395, 12
        %v811 = vpop.permute.xlu0 %810
        %812 = vrot.lane.b32.xlu0 %v396, 12
        %v813 = vpop.permute.xlu0 %812
        %814 = vrot.lane.b32.xlu0 %v397, 12
        %v815 = vpop.permute.xlu0 %814
        %816 = vrot.lane.b32.xlu0 %v398, 12
        %v817 = vpop.permute.xlu0 %816
        %818 = vrot.lane.b32.xlu0 %v399, 12
        %v819 = vpop.permute.xlu0 %818
        %820 = vrot.lane.b32.xlu0 %v400, 12
        %v821 = vpop.permute.xlu0 %820
        %822 = vrot.lane.b32.xlu0 %v401, 12
        %v823 = vpop.permute.xlu0 %822
        %824 = vrot.lane.b32.xlu0 %v402, 12
        %v825 = vpop.permute.xlu0 %824
        %826 = vrot.lane.b32.xlu0 %v403, 12
        %v827 = vpop.permute.xlu0 %826
        %828 = vrot.lane.b32.xlu0 %v404, 12
        %v829 = vpop.permute.xlu0 %828
        %830 = vrot.lane.b32.xlu0 %v405, 12
        %v831 = vpop.permute.xlu0 %830
        %832 = vrot.lane.b32.xlu0 %v406, 12
        %v833 = vpop.permute.xlu0 %832
        %834 = vrot.lane.b32.xlu0 %v407, 12
        %v835 = vpop.permute.xlu0 %834
        %836 = vrot.lane.b32.xlu0 %v408, 12
        %v837 = vpop.permute.xlu0 %836
        %838 = vrot.lane.b32.xlu0 %v409, 12
        %v839 = vpop.permute.xlu0 %838
        %840 = vrot.lane.b32.xlu0 %v410, 12
        %v841 = vpop.permute.xlu0 %840
        %842 = vrot.lane.b32.xlu0 %v411, 12
        %v843 = vpop.permute.xlu0 %842
        %844 = vrot.lane.b32.xlu0 %v412, 12
        %v845 = vpop.permute.xlu0 %844
        %846 = vrot.lane.b32.xlu0 %v413, 12
        %v847 = vpop.permute.xlu0 %846
        %848 = vrot.lane.b32.xlu0 %v414, 12
        %v849 = vpop.permute.xlu0 %848
        %850 = vrot.lane.b32.xlu0 %v415, 12
        %v851 = vpop.permute.xlu0 %850
        %852 = vrot.lane.b32.xlu0 %v416, 12
        %v853 = vpop.permute.xlu0 %852
        %854 = vrot.lane.b32.xlu0 %v417, 12
        %v855 = vpop.permute.xlu0 %854
        %856 = vrot.lane.b32.xlu0 %v418, 12
        %v857 = vpop.permute.xlu0 %856
        %858 = vrot.lane.b32.xlu0 %v419, 12
        %v859 = vpop.permute.xlu0 %858
        %860 = vrot.lane.b32.xlu0 %v420, 12
        %v861 = vpop.permute.xlu0 %860
        %862 = vrot.lane.b32.xlu0 %v421, 12
        %v863 = vpop.permute.xlu0 %862
        %898 = vrot.lane.b32.xlu0 %v288, 16
        %v899 = vpop.permute.xlu0 %898
        %900 = vrot.lane.b32.xlu0 %v289, 16
        %v901 = vpop.permute.xlu0 %900
        %902 = vrot.lane.b32.xlu0 %v290, 16
        %v903 = vpop.permute.xlu0 %902
        %904 = vrot.lane.b32.xlu0 %v291, 16
        %v905 = vpop.permute.xlu0 %904
        %906 = vrot.lane.b32.xlu0 %v292, 16
        %v907 = vpop.permute.xlu0 %906
        %908 = vrot.lane.b32.xlu0 %v293, 16
        %v909 = vpop.permute.xlu0 %908
        %910 = vrot.lane.b32.xlu0 %v294, 16
        %v911 = vpop.permute.xlu0 %910
        %912 = vrot.lane.b32.xlu0 %v295, 16
        %v913 = vpop.permute.xlu0 %912
        %914 = vrot.lane.b32.xlu0 %v296, 16
        %v915 = vpop.permute.xlu0 %914
        %916 = vrot.lane.b32.xlu0 %v297, 16
        %v917 = vpop.permute.xlu0 %916
        %918 = vrot.lane.b32.xlu0 %v298, 16
        %v919 = vpop.permute.xlu0 %918
        %920 = vrot.lane.b32.xlu0 %v299, 16
        %v921 = vpop.permute.xlu0 %920
        %922 = vrot.lane.b32.xlu0 %v300, 16
        %v923 = vpop.permute.xlu0 %922
        %924 = vrot.lane.b32.xlu0 %v301, 16
        %v925 = vpop.permute.xlu0 %924
        %926 = vrot.lane.b32.xlu0 %v302, 16
        %v927 = vpop.permute.xlu0 %926
        %928 = vrot.lane.b32.xlu0 %v303, 16
        %v929 = vpop.permute.xlu0 %928
        %930 = vrot.lane.b32.xlu0 %v304, 16
        %v931 = vpop.permute.xlu0 %930
        %932 = vrot.lane.b32.xlu0 %v305, 16
        %v933 = vpop.permute.xlu0 %932
        %934 = vrot.lane.b32.xlu0 %v306, 16
        %v935 = vpop.permute.xlu0 %934
        %936 = vrot.lane.b32.xlu0 %v307, 16
        %v937 = vpop.permute.xlu0 %936
        %938 = vrot.lane.b32.xlu0 %v308, 16
        %v939 = vpop.permute.xlu0 %938
        %940 = vrot.lane.b32.xlu0 %v309, 16
        %v941 = vpop.permute.xlu0 %940
        %942 = vrot.lane.b32.xlu0 %v310, 16
        %v943 = vpop.permute.xlu0 %942
        %944 = vrot.lane.b32.xlu0 %v311, 16
        %v945 = vpop.permute.xlu0 %944
        %946 = vrot.lane.b32.xlu0 %v312, 16
        %v947 = vpop.permute.xlu0 %946
        %948 = vrot.lane.b32.xlu0 %v313, 16
        %v949 = vpop.permute.xlu0 %948
        %950 = vrot.lane.b32.xlu0 %v314, 16
        %v951 = vpop.permute.xlu0 %950
        %952 = vrot.lane.b32.xlu0 %v315, 16
        %v953 = vpop.permute.xlu0 %952
        %954 = vrot.lane.b32.xlu0 %v316, 16
        %v955 = vpop.permute.xlu0 %954
        %956 = vrot.lane.b32.xlu0 %v317, 16
        %v957 = vpop.permute.xlu0 %956
        %958 = vrot.lane.b32.xlu0 %v318, 16
        %v959 = vpop.permute.xlu0 %958
        %960 = vrot.lane.b32.xlu0 %v319, 16
        %v961 = vpop.permute.xlu0 %960
        %996 = vrot.lane.b32.xlu0 %v489, 20
        %v997 = vpop.permute.xlu0 %996
        %998 = vrot.lane.b32.xlu0 %v490, 20
        %v999 = vpop.permute.xlu0 %998
        %1000 = vrot.lane.b32.xlu0 %v491, 20
        %v1001 = vpop.permute.xlu0 %1000
        %1002 = vrot.lane.b32.xlu0 %v492, 20
        %v1003 = vpop.permute.xlu0 %1002
        %1004 = vrot.lane.b32.xlu0 %v493, 20
        %v1005 = vpop.permute.xlu0 %1004
        %1006 = vrot.lane.b32.xlu0 %v494, 20
        %v1007 = vpop.permute.xlu0 %1006
        %1008 = vrot.lane.b32.xlu0 %v495, 20
        %v1009 = vpop.permute.xlu0 %1008
        %1010 = vrot.lane.b32.xlu0 %v496, 20
        %v1011 = vpop.permute.xlu0 %1010
        %1012 = vrot.lane.b32.xlu0 %v497, 20
        %v1013 = vpop.permute.xlu0 %1012
        %1014 = vrot.lane.b32.xlu0 %v498, 20
        %v1015 = vpop.permute.xlu0 %1014
        %1016 = vrot.lane.b32.xlu0 %v499, 20
        %v1017 = vpop.permute.xlu0 %1016
        %1018 = vrot.lane.b32.xlu0 %v500, 20
        %v1019 = vpop.permute.xlu0 %1018
        %1020 = vrot.lane.b32.xlu0 %v501, 20
        %v1021 = vpop.permute.xlu0 %1020
        %1022 = vrot.lane.b32.xlu0 %v502, 20
        %v1023 = vpop.permute.xlu0 %1022
        %1024 = vrot.lane.b32.xlu0 %v503, 20
        %v1025 = vpop.permute.xlu0 %1024
        %1026 = vrot.lane.b32.xlu0 %v504, 20
        %v1027 = vpop.permute.xlu0 %1026
        %1028 = vrot.lane.b32.xlu0 %v505, 20
        %v1029 = vpop.permute.xlu0 %1028
        %1030 = vrot.lane.b32.xlu0 %v506, 20
        %v1031 = vpop.permute.xlu0 %1030
        %1032 = vrot.lane.b32.xlu0 %v507, 20
        %v1033 = vpop.permute.xlu0 %1032
        %1034 = vrot.lane.b32.xlu0 %v508, 20
        %v1035 = vpop.permute.xlu0 %1034
        %1036 = vrot.lane.b32.xlu0 %v509, 20
        %v1037 = vpop.permute.xlu0 %1036
        %1038 = vrot.lane.b32.xlu0 %v510, 20
        %v1039 = vpop.permute.xlu0 %1038
        %1040 = vrot.lane.b32.xlu0 %v511, 20
        %v1041 = vpop.permute.xlu0 %1040
        %1042 = vrot.lane.b32.xlu0 %v512, 20
        %v1043 = vpop.permute.xlu0 %1042
        %1044 = vrot.lane.b32.xlu0 %v513, 20
        %v1045 = vpop.permute.xlu0 %1044
        %1046 = vrot.lane.b32.xlu0 %v514, 20
        %v1047 = vpop.permute.xlu0 %1046
        %1048 = vrot.lane.b32.xlu0 %v515, 20
        %v1049 = vpop.permute.xlu0 %1048
        %1050 = vrot.lane.b32.xlu0 %v516, 20
        %v1051 = vpop.permute.xlu0 %1050
        %1052 = vrot.lane.b32.xlu0 %v517, 20
        %v1053 = vpop.permute.xlu0 %1052
        %1054 = vrot.lane.b32.xlu0 %v518, 20
        %v1055 = vpop.permute.xlu0 %1054
        %1056 = vrot.lane.b32.xlu0 %v519, 20
        %v1057 = vpop.permute.xlu0 %1056
        %1058 = vrot.lane.b32.xlu0 %v520, 20
        %v1059 = vpop.permute.xlu0 %1058
        %1092 = vrot.lane.b32.xlu0 %v392, 24
        %v1093 = vpop.permute.xlu0 %1092
        %1094 = vrot.lane.b32.xlu0 %v393, 24
        %v1095 = vpop.permute.xlu0 %1094
        %1096 = vrot.lane.b32.xlu0 %v394, 24
        %v1097 = vpop.permute.xlu0 %1096
        %1098 = vrot.lane.b32.xlu0 %v395, 24
        %v1099 = vpop.permute.xlu0 %1098
        %1100 = vrot.lane.b32.xlu0 %v396, 24
        %v1101 = vpop.permute.xlu0 %1100
        %1102 = vrot.lane.b32.xlu0 %v397, 24
        %v1103 = vpop.permute.xlu0 %1102
        %1104 = vrot.lane.b32.xlu0 %v398, 24
        %v1105 = vpop.permute.xlu0 %1104
        %1106 = vrot.lane.b32.xlu0 %v399, 24
        %v1107 = vpop.permute.xlu0 %1106
        %1108 = vrot.lane.b32.xlu0 %v400, 24
        %v1109 = vpop.permute.xlu0 %1108
        %1110 = vrot.lane.b32.xlu0 %v401, 24
        %v1111 = vpop.permute.xlu0 %1110
        %1112 = vrot.lane.b32.xlu0 %v402, 24
        %v1113 = vpop.permute.xlu0 %1112
        %1114 = vrot.lane.b32.xlu0 %v403, 24
        %v1115 = vpop.permute.xlu0 %1114
        %1116 = vrot.lane.b32.xlu0 %v404, 24
        %v1117 = vpop.permute.xlu0 %1116
        %1118 = vrot.lane.b32.xlu0 %v405, 24
        %v1119 = vpop.permute.xlu0 %1118
        %1120 = vrot.lane.b32.xlu0 %v406, 24
        %v1121 = vpop.permute.xlu0 %1120
        %1122 = vrot.lane.b32.xlu0 %v407, 24
        %v1123 = vpop.permute.xlu0 %1122
        %1124 = vrot.lane.b32.xlu0 %v408, 24
        %v1125 = vpop.permute.xlu0 %1124
        %1126 = vrot.lane.b32.xlu0 %v409, 24
        %v1127 = vpop.permute.xlu0 %1126
        %1128 = vrot.lane.b32.xlu0 %v410, 24
        %v1129 = vpop.permute.xlu0 %1128
        %1130 = vrot.lane.b32.xlu0 %v411, 24
        %v1131 = vpop.permute.xlu0 %1130
        %1132 = vrot.lane.b32.xlu0 %v412, 24
        %v1133 = vpop.permute.xlu0 %1132
        %1134 = vrot.lane.b32.xlu0 %v413, 24
        %v1135 = vpop.permute.xlu0 %1134
        %1136 = vrot.lane.b32.xlu0 %v414, 24
        %v1137 = vpop.permute.xlu0 %1136
        %1138 = vrot.lane.b32.xlu0 %v415, 24
        %v1139 = vpop.permute.xlu0 %1138
        %1140 = vrot.lane.b32.xlu0 %v416, 24
        %v1141 = vpop.permute.xlu0 %1140
        %1142 = vrot.lane.b32.xlu0 %v417, 24
        %v1143 = vpop.permute.xlu0 %1142
        %1144 = vrot.lane.b32.xlu0 %v418, 24
        %v1145 = vpop.permute.xlu0 %1144
        %1146 = vrot.lane.b32.xlu0 %v419, 24
        %v1147 = vpop.permute.xlu0 %1146
        %1148 = vrot.lane.b32.xlu0 %v420, 24
        %v1149 = vpop.permute.xlu0 %1148
        %1150 = vrot.lane.b32.xlu0 %v421, 24
        %v1151 = vpop.permute.xlu0 %1150
        %1152 = vrot.lane.b32.xlu0 0.0, 24
        %v1153 = vpop.permute.xlu0 %1152
        %1185 = vrot.lane.b32.xlu0 %v290, 28
        %v1186 = vpop.permute.xlu0 %1185
        %1187 = vrot.lane.b32.xlu0 %v291, 28
        %v1188 = vpop.permute.xlu0 %1187
        %1189 = vrot.lane.b32.xlu0 %v292, 28
        %v1190 = vpop.permute.xlu0 %1189
        %1191 = vrot.lane.b32.xlu0 %v293, 28
        %v1192 = vpop.permute.xlu0 %1191
        %1193 = vrot.lane.b32.xlu0 %v294, 28
        %v1194 = vpop.permute.xlu0 %1193
        %1195 = vrot.lane.b32.xlu0 %v295, 28
        %v1196 = vpop.permute.xlu0 %1195
        %1197 = vrot.lane.b32.xlu0 %v296, 28
        %v1198 = vpop.permute.xlu0 %1197
        %1199 = vrot.lane.b32.xlu0 %v297, 28
        %v1200 = vpop.permute.xlu0 %1199
        %1201 = vrot.lane.b32.xlu0 %v298, 28
        %v1202 = vpop.permute.xlu0 %1201
        %1203 = vrot.lane.b32.xlu0 %v299, 28
        %v1204 = vpop.permute.xlu0 %1203
        %1205 = vrot.lane.b32.xlu0 %v300, 28
        %v1206 = vpop.permute.xlu0 %1205
        %1207 = vrot.lane.b32.xlu0 %v301, 28
        %v1208 = vpop.permute.xlu0 %1207
        %1209 = vrot.lane.b32.xlu0 %v302, 28
        %v1210 = vpop.permute.xlu0 %1209
        %1211 = vrot.lane.b32.xlu0 %v303, 28
        %v1212 = vpop.permute.xlu0 %1211
        %1213 = vrot.lane.b32.xlu0 %v304, 28
        %v1214 = vpop.permute.xlu0 %1213
        %1215 = vrot.lane.b32.xlu0 %v305, 28
        %v1216 = vpop.permute.xlu0 %1215
        %1217 = vrot.lane.b32.xlu0 %v306, 28
        %v1218 = vpop.permute.xlu0 %1217
        %1219 = vrot.lane.b32.xlu0 %v307, 28
        %v1220 = vpop.permute.xlu0 %1219
        %1221 = vrot.lane.b32.xlu0 %v308, 28
        %v1222 = vpop.permute.xlu0 %1221
        %1223 = vrot.lane.b32.xlu0 %v309, 28
        %v1224 = vpop.permute.xlu0 %1223
        %1225 = vrot.lane.b32.xlu0 %v310, 28
        %v1226 = vpop.permute.xlu0 %1225
        %1227 = vrot.lane.b32.xlu0 %v311, 28
        %v1228 = vpop.permute.xlu0 %1227
        %1229 = vrot.lane.b32.xlu0 %v312, 28
        %v1230 = vpop.permute.xlu0 %1229
        %1231 = vrot.lane.b32.xlu0 %v313, 28
        %v1232 = vpop.permute.xlu0 %1231
        %1233 = vrot.lane.b32.xlu0 %v314, 28
        %v1234 = vpop.permute.xlu0 %1233
        %1235 = vrot.lane.b32.xlu0 %v315, 28
        %v1236 = vpop.permute.xlu0 %1235
        %1237 = vrot.lane.b32.xlu0 %v316, 28
        %v1238 = vpop.permute.xlu0 %1237
        %1239 = vrot.lane.b32.xlu0 %v317, 28
        %v1240 = vpop.permute.xlu0 %1239
        %1241 = vrot.lane.b32.xlu0 %v318, 28
        %v1242 = vpop.permute.xlu0 %1241
        %1243 = vrot.lane.b32.xlu0 %v319, 28
        %v1244 = vpop.permute.xlu0 %1243
        %1245 = vrot.lane.b32.xlu0 0.0, 28
        %v1246 = vpop.permute.xlu0 %1245
        %1278 = vrot.lane.b32.xlu0 %v491, 32
        %v1279 = vpop.permute.xlu0 %1278
        %1280 = vrot.lane.b32.xlu0 %v492, 32
        %v1281 = vpop.permute.xlu0 %1280
        %1282 = vrot.lane.b32.xlu0 %v493, 32
        %v1283 = vpop.permute.xlu0 %1282
        %1284 = vrot.lane.b32.xlu0 %v494, 32
        %v1285 = vpop.permute.xlu0 %1284
        %1286 = vrot.lane.b32.xlu0 %v495, 32
        %v1287 = vpop.permute.xlu0 %1286
        %1288 = vrot.lane.b32.xlu0 %v496, 32
        %v1289 = vpop.permute.xlu0 %1288
        %1290 = vrot.lane.b32.xlu0 %v497, 32
        %v1291 = vpop.permute.xlu0 %1290
        %1292 = vrot.lane.b32.xlu0 %v498, 32
        %v1293 = vpop.permute.xlu0 %1292
        %1294 = vrot.lane.b32.xlu0 %v499, 32
        %v1295 = vpop.permute.xlu0 %1294
        %1296 = vrot.lane.b32.xlu0 %v500, 32
        %v1297 = vpop.permute.xlu0 %1296
        %1298 = vrot.lane.b32.xlu0 %v501, 32
        %v1299 = vpop.permute.xlu0 %1298
        %1300 = vrot.lane.b32.xlu0 %v502, 32
        %v1301 = vpop.permute.xlu0 %1300
        %1302 = vrot.lane.b32.xlu0 %v503, 32
        %v1303 = vpop.permute.xlu0 %1302
        %1304 = vrot.lane.b32.xlu0 %v504, 32
        %v1305 = vpop.permute.xlu0 %1304
        %1306 = vrot.lane.b32.xlu0 %v505, 32
        %v1307 = vpop.permute.xlu0 %1306
        %1308 = vrot.lane.b32.xlu0 %v506, 32
        %v1309 = vpop.permute.xlu0 %1308
        %1310 = vrot.lane.b32.xlu0 %v507, 32
        %v1311 = vpop.permute.xlu0 %1310
        %1312 = vrot.lane.b32.xlu0 %v508, 32
        %v1313 = vpop.permute.xlu0 %1312
        %1314 = vrot.lane.b32.xlu0 %v509, 32
        %v1315 = vpop.permute.xlu0 %1314
        %1316 = vrot.lane.b32.xlu0 %v510, 32
        %v1317 = vpop.permute.xlu0 %1316
        %1318 = vrot.lane.b32.xlu0 %v511, 32
        %v1319 = vpop.permute.xlu0 %1318
        %1320 = vrot.lane.b32.xlu0 %v512, 32
        %v1321 = vpop.permute.xlu0 %1320
        %1322 = vrot.lane.b32.xlu0 %v513, 32
        %v1323 = vpop.permute.xlu0 %1322
        %1324 = vrot.lane.b32.xlu0 %v514, 32
        %v1325 = vpop.permute.xlu0 %1324
        %1326 = vrot.lane.b32.xlu0 %v515, 32
        %v1327 = vpop.permute.xlu0 %1326
        %1328 = vrot.lane.b32.xlu0 %v516, 32
        %v1329 = vpop.permute.xlu0 %1328
        %1330 = vrot.lane.b32.xlu0 %v517, 32
        %v1331 = vpop.permute.xlu0 %1330
        %1332 = vrot.lane.b32.xlu0 %v518, 32
        %v1333 = vpop.permute.xlu0 %1332
        %1334 = vrot.lane.b32.xlu0 %v519, 32
        %v1335 = vpop.permute.xlu0 %1334
        %1336 = vrot.lane.b32.xlu0 %v520, 32
        %v1337 = vpop.permute.xlu0 %1336
        %1338 = vrot.lane.b32.xlu0 0.0, 32
        %v1339 = vpop.permute.xlu0 %1338
        %vm1371 = vcmask 31744
        %v1372 = vsel %vm1371, 0.0, %v553
        %v1373 = vsel %vm1371, %v390, %v555
        %v1374 = vsel %vm1371, %v391, %v557
        %v1375 = vsel %vm1371, %v392, %v559
        %v1376 = vsel %vm1371, %v393, %v561
        %v1377 = vsel %vm1371, %v394, %v563
        %v1378 = vsel %vm1371, %v395, %v565
        %v1379 = vsel %vm1371, %v396, %v567
        %v1380 = vsel %vm1371, %v397, %v569
        %v1381 = vsel %vm1371, %v398, %v571
        %v1382 = vsel %vm1371, %v399, %v573
        %v1383 = vsel %vm1371, %v400, %v575
        %v1384 = vsel %vm1371, %v401, %v577
        %v1385 = vsel %vm1371, %v402, %v579
        %v1386 = vsel %vm1371, %v403, %v581
        %v1387 = vsel %vm1371, %v404, %v583
        %v1388 = vsel %vm1371, %v405, %v585
        %v1389 = vsel %vm1371, %v406, %v587
        %v1390 = vsel %vm1371, %v407, %v589
        %v1391 = vsel %vm1371, %v408, %v591
        %v1392 = vsel %vm1371, %v409, %v593
        %v1393 = vsel %vm1371, %v410, %v595
        %v1394 = vsel %vm1371, %v411, %v597
        %v1395 = vsel %vm1371, %v412, %v599
        %v1396 = vsel %vm1371, %v413, %v601
        %v1397 = vsel %vm1371, %v414, %v603
        %v1398 = vsel %vm1371, %v415, %v605
        %v1399 = vsel %vm1371, %v416, %v607
        %v1400 = vsel %vm1371, %v417, %v609
        %v1401 = vsel %vm1371, %v418, %v611
        %v1402 = vsel %vm1371, %v419, %v613
        %vm1403 = vcmask 64512
        %v1404 = vsel %vm1403, %v1372, %v676
        %v1405 = vsel %vm1403, %v1373, %v678
        %v1406 = vsel %vm1403, %v1374, %v680
        %v1407 = vsel %vm1403, %v1375, %v682
        %v1408 = vsel %vm1403, %v1376, %v684
        %v1409 = vsel %vm1403, %v1377, %v686
        %v1410 = vsel %vm1403, %v1378, %v688
        %v1411 = vsel %vm1403, %v1379, %v690
        %v1412 = vsel %vm1403, %v1380, %v692
        %v1413 = vsel %vm1403, %v1381, %v694
        %v1414 = vsel %vm1403, %v1382, %v696
        %v1415 = vsel %vm1403, %v1383, %v698
        %v1416 = vsel %vm1403, %v1384, %v700
        %v1417 = vsel %vm1403, %v1385, %v702
        %v1418 = vsel %vm1403, %v1386, %v704
        %v1419 = vsel %vm1403, %v1387, %v706
        %v1420 = vsel %vm1403, %v1388, %v708
        %v1421 = vsel %vm1403, %v1389, %v710
        %v1422 = vsel %vm1403, %v1390, %v712
        %v1423 = vsel %vm1403, %v1391, %v714
        %v1424 = vsel %vm1403, %v1392, %v716
        %v1425 = vsel %vm1403, %v1393, %v718
        %v1426 = vsel %vm1403, %v1394, %v720
        %v1427 = vsel %vm1403, %v1395, %v722
        %v1428 = vsel %vm1403, %v1396, %v724
        %v1429 = vsel %vm1403, %v1397, %v726
        %v1430 = vsel %vm1403, %v1398, %v728
        %v1431 = vsel %vm1403, %v1399, %v730
        %v1432 = vsel %vm1403, %v1400, %v732
        %v1433 = vsel %vm1403, %v1401, %v734
        %v1434 = vsel %vm1403, %v1402, %v736
        %vm1435 = vcmask 97280
        %v1436 = vsel %vm1435, %v1404, %v801
        %v1437 = vsel %vm1435, %v1404, %v803
        %v1438 = vsel %vm1435, %v1405, %v805
        %v1439 = vsel %vm1435, %v1406, %v807
        %v1440 = vsel %vm1435, %v1407, %v809
        %v1441 = vsel %vm1435, %v1408, %v811
        %v1442 = vsel %vm1435, %v1409, %v813
        %v1443 = vsel %vm1435, %v1410, %v815
        %v1444 = vsel %vm1435, %v1411, %v817
        %v1445 = vsel %vm1435, %v1412, %v819
        %v1446 = vsel %vm1435, %v1413, %v821
        %v1447 = vsel %vm1435, %v1414, %v823
        %v1448 = vsel %vm1435, %v1415, %v825
        %v1449 = vsel %vm1435, %v1416, %v827
        %v1450 = vsel %vm1435, %v1417, %v829
        %v1451 = vsel %vm1435, %v1418, %v831
        %v1452 = vsel %vm1435, %v1419, %v833
        %v1453 = vsel %vm1435, %v1420, %v835
        %v1454 = vsel %vm1435, %v1421, %v837
        %v1455 = vsel %vm1435, %v1422, %v839
        %v1456 = vsel %vm1435, %v1423, %v841
        %v1457 = vsel %vm1435, %v1424, %v843
        %v1458 = vsel %vm1435, %v1425, %v845
        %v1459 = vsel %vm1435, %v1426, %v847
        %v1460 = vsel %vm1435, %v1427, %v849
        %v1461 = vsel %vm1435, %v1428, %v851
        %v1462 = vsel %vm1435, %v1429, %v853
        %v1463 = vsel %vm1435, %v1430, %v855
        %v1464 = vsel %vm1435, %v1431, %v857
        %v1465 = vsel %vm1435, %v1432, %v859
        %v1466 = vsel %vm1435, %v1433, %v861
        %v1467 = vsel %vm1435, %v1434, %v863
        %vm1468 = vcmask 130048
        %v1469 = vsel %vm1468, %v1436, %v899
        %v1470 = vsel %vm1468, %v1437, %v901
        %v1471 = vsel %vm1468, %v1438, %v903
        %v1472 = vsel %vm1468, %v1439, %v905
        %v1473 = vsel %vm1468, %v1440, %v907
        %v1474 = vsel %vm1468, %v1441, %v909
        %v1475 = vsel %vm1468, %v1442, %v911
        %v1476 = vsel %vm1468, %v1443, %v913
        %v1477 = vsel %vm1468, %v1444, %v915
        %v1478 = vsel %vm1468, %v1445, %v917
        %v1479 = vsel %vm1468, %v1446, %v919
        %v1480 = vsel %vm1468, %v1447, %v921
        %v1481 = vsel %vm1468, %v1448, %v923
        %v1482 = vsel %vm1468, %v1449, %v925
        %v1483 = vsel %vm1468, %v1450, %v927
        %v1484 = vsel %vm1468, %v1451, %v929
        %v1485 = vsel %vm1468, %v1452, %v931
        %v1486 = vsel %vm1468, %v1453, %v933
        %v1487 = vsel %vm1468, %v1454, %v935
        %v1488 = vsel %vm1468, %v1455, %v937
        %v1489 = vsel %vm1468, %v1456, %v939
        %v1490 = vsel %vm1468, %v1457, %v941
        %v1491 = vsel %vm1468, %v1458, %v943
        %v1492 = vsel %vm1468, %v1459, %v945
        %v1493 = vsel %vm1468, %v1460, %v947
        %v1494 = vsel %vm1468, %v1461, %v949
        %v1495 = vsel %vm1468, %v1462, %v951
        %v1496 = vsel %vm1468, %v1463, %v953
        %v1497 = vsel %vm1468, %v1464, %v955
        %v1498 = vsel %vm1468, %v1465, %v957
        %v1499 = vsel %vm1468, %v1466, %v959
        %v1500 = vsel %vm1468, %v1467, %v961
        %vm1501 = vcmask 162816
        %v1502 = vsel %vm1501, %v1469, %v997
        %v1503 = vsel %vm1501, %v1470, %v999
        %v1504 = vsel %vm1501, %v1471, %v1001
        %v1505 = vsel %vm1501, %v1472, %v1003
        %v1506 = vsel %vm1501, %v1473, %v1005
        %v1507 = vsel %vm1501, %v1474, %v1007
        %v1508 = vsel %vm1501, %v1475, %v1009
        %v1509 = vsel %vm1501, %v1476, %v1011
        %v1510 = vsel %vm1501, %v1477, %v1013
        %v1511 = vsel %vm1501, %v1478, %v1015
        %v1512 = vsel %vm1501, %v1479, %v1017
        %v1513 = vsel %vm1501, %v1480, %v1019
        %v1514 = vsel %vm1501, %v1481, %v1021
        %v1515 = vsel %vm1501, %v1482, %v1023
        %v1516 = vsel %vm1501, %v1483, %v1025
        %v1517 = vsel %vm1501, %v1484, %v1027
        %v1518 = vsel %vm1501, %v1485, %v1029
        %v1519 = vsel %vm1501, %v1486, %v1031
        %v1520 = vsel %vm1501, %v1487, %v1033
        %v1521 = vsel %vm1501, %v1488, %v1035
        %v1522 = vsel %vm1501, %v1489, %v1037
        %v1523 = vsel %vm1501, %v1490, %v1039
        %v1524 = vsel %vm1501, %v1491, %v1041
        %v1525 = vsel %vm1501, %v1492, %v1043
        %v1526 = vsel %vm1501, %v1493, %v1045
        %v1527 = vsel %vm1501, %v1494, %v1047
        %v1528 = vsel %vm1501, %v1495, %v1049
        %v1529 = vsel %vm1501, %v1496, %v1051
        %v1530 = vsel %vm1501, %v1497, %v1053
        %v1531 = vsel %vm1501, %v1498, %v1055
        %v1532 = vsel %vm1501, %v1499, %v1057
        %v1533 = vsel %vm1501, %v1500, %v1059
        %vm1534 = vcmask 195584
        %v1535 = vsel %vm1534, %v1502, %v1093
        %v1536 = vsel %vm1534, %v1503, %v1095
        %v1537 = vsel %vm1534, %v1504, %v1097
        %v1538 = vsel %vm1534, %v1505, %v1099
        %v1539 = vsel %vm1534, %v1506, %v1101
        %v1540 = vsel %vm1534, %v1507, %v1103
        %v1541 = vsel %vm1534, %v1508, %v1105
        %v1542 = vsel %vm1534, %v1509, %v1107
        %v1543 = vsel %vm1534, %v1510, %v1109
        %v1544 = vsel %vm1534, %v1511, %v1111
        %v1545 = vsel %vm1534, %v1512, %v1113
        %v1546 = vsel %vm1534, %v1513, %v1115
        %v1547 = vsel %vm1534, %v1514, %v1117
        %v1548 = vsel %vm1534, %v1515, %v1119
        %v1549 = vsel %vm1534, %v1516, %v1121
        %v1550 = vsel %vm1534, %v1517, %v1123
        %v1551 = vsel %vm1534, %v1518, %v1125
        %v1552 = vsel %vm1534, %v1519, %v1127
        %v1553 = vsel %vm1534, %v1520, %v1129
        %v1554 = vsel %vm1534, %v1521, %v1131
        %v1555 = vsel %vm1534, %v1522, %v1133
        %v1556 = vsel %vm1534, %v1523, %v1135
        %v1557 = vsel %vm1534, %v1524, %v1137
        %v1558 = vsel %vm1534, %v1525, %v1139
        %v1559 = vsel %vm1534, %v1526, %v1141
        %v1560 = vsel %vm1534, %v1527, %v1143
        %v1561 = vsel %vm1534, %v1528, %v1145
        %v1562 = vsel %vm1534, %v1529, %v1147
        %v1563 = vsel %vm1534, %v1530, %v1149
        %v1564 = vsel %vm1534, %v1531, %v1151
        %v1565 = vsel %vm1534, %v1532, %v1153
        %v1566 = vsel %vm1534, %v1533, %v1153
        %vm1567 = vcmask 228352
        %v1568 = vsel %vm1567, %v1535, %v1186
        %v1569 = vsel %vm1567, %v1536, %v1188
        %v1570 = vsel %vm1567, %v1537, %v1190
        %v1571 = vsel %vm1567, %v1538, %v1192
        %v1572 = vsel %vm1567, %v1539, %v1194
        %v1573 = vsel %vm1567, %v1540, %v1196
        %v1574 = vsel %vm1567, %v1541, %v1198
        %v1575 = vsel %vm1567, %v1542, %v1200
        %v1576 = vsel %vm1567, %v1543, %v1202
        %v1577 = vsel %vm1567, %v1544, %v1204
        %v1578 = vsel %vm1567, %v1545, %v1206
        %v1579 = vsel %vm1567, %v1546, %v1208
        %v1580 = vsel %vm1567, %v1547, %v1210
        %v1581 = vsel %vm1567, %v1548, %v1212
        %v1582 = vsel %vm1567, %v1549, %v1214
        %v1583 = vsel %vm1567, %v1550, %v1216
        %v1584 = vsel %vm1567, %v1551, %v1218
        %v1585 = vsel %vm1567, %v1552, %v1220
        %v1586 = vsel %vm1567, %v1553, %v1222
        %v1587 = vsel %vm1567, %v1554, %v1224
        %v1588 = vsel %vm1567, %v1555, %v1226
        %v1589 = vsel %vm1567, %v1556, %v1228
        %v1590 = vsel %vm1567, %v1557, %v1230
        %v1591 = vsel %vm1567, %v1558, %v1232
        %v1592 = vsel %vm1567, %v1559, %v1234
        %v1593 = vsel %vm1567, %v1560, %v1236
        %v1594 = vsel %vm1567, %v1561, %v1238
        %v1595 = vsel %vm1567, %v1562, %v1240
        %v1596 = vsel %vm1567, %v1563, %v1242
        %v1597 = vsel %vm1567, %v1564, %v1244
        %v1598 = vsel %vm1567, %v1565, %v1246
        %v1599 = vsel %vm1567, %v1566, %v1246
        %vm1600 = vcmask 261120
        %v1601 = vsel %vm1600, %v1568, %v1279
        %v1602 = vsel %vm1600, %v1569, %v1281
        %v1603 = vsel %vm1600, %v1570, %v1283
        %v1604 = vsel %vm1600, %v1571, %v1285
        %v1605 = vsel %vm1600, %v1572, %v1287
        %v1606 = vsel %vm1600, %v1573, %v1289
        %v1607 = vsel %vm1600, %v1574, %v1291
        %v1608 = vsel %vm1600, %v1575, %v1293
        %v1609 = vsel %vm1600, %v1576, %v1295
        %v1610 = vsel %vm1600, %v1577, %v1297
        %v1611 = vsel %vm1600, %v1578, %v1299
        %v1612 = vsel %vm1600, %v1579, %v1301
        %v1613 = vsel %vm1600, %v1580, %v1303
        %v1614 = vsel %vm1600, %v1581, %v1305
        %v1615 = vsel %vm1600, %v1582, %v1307
        %v1616 = vsel %vm1600, %v1583, %v1309
        %v1617 = vsel %vm1600, %v1584, %v1311
        %v1618 = vsel %vm1600, %v1585, %v1313
        %v1619 = vsel %vm1600, %v1586, %v1315
        %v1620 = vsel %vm1600, %v1587, %v1317
        %v1621 = vsel %vm1600, %v1588, %v1319
        %v1622 = vsel %vm1600, %v1589, %v1321
        %v1623 = vsel %vm1600, %v1590, %v1323
        %v1624 = vsel %vm1600, %v1591, %v1325
        %v1625 = vsel %vm1600, %v1592, %v1327
        %v1626 = vsel %vm1600, %v1593, %v1329
        %v1627 = vsel %vm1600, %v1594, %v1331
        %v1628 = vsel %vm1600, %v1595, %v1333
        %v1629 = vsel %vm1600, %v1596, %v1335
        %v1630 = vsel %vm1600, %v1597, %v1337
        %v1631 = vsel %vm1600, %v1598, %v1339
        %v1632 = vsel %vm1600, %v1599, %v1339
        %v1633 = vpack.c.bf16 %v1602, %v1601
        %v1634 = vpack.c.bf16 %v1604, %v1603
        %v1635 = vpack.c.bf16 %v1606, %v1605
        %v1636 = vpack.c.bf16 %v1608, %v1607
        %v1637 = vpack.c.bf16 %v1610, %v1609
        %v1638 = vpack.c.bf16 %v1612, %v1611
        %v1639 = vpack.c.bf16 %v1614, %v1613
        %v1640 = vpack.c.bf16 %v1616, %v1615
        %v1641 = vpack.c.bf16 %v1618, %v1617
        %v1642 = vpack.c.bf16 %v1620, %v1619
        %v1643 = vpack.c.bf16 %v1622, %v1621
        %v1644 = vpack.c.bf16 %v1624, %v1623
        %v1645 = vpack.c.bf16 %v1626, %v1625
        %v1646 = vpack.c.bf16 %v1628, %v1627
        %v1647 = vpack.c.bf16 %v1630, %v1629
        %v1648 = vpack.c.bf16 %v1632, %v1631
        %v1649 = vld [vmem:[%s248] sm:$0xf]
        %v1650 = vld [vmem:[%s248 + $0x4] sm:$0xf]
        %v1651 = vld [vmem:[%s248 + $0x8] sm:$0xf]
        %v1652 = vld [vmem:[%s248 + $0xc] sm:$0xf]
        %v1653 = vld [vmem:[%s248 + $0x10] sm:$0x3]
        %v1659 = vunpack.c.l.b16 %v1649
        %v1660 = vunpack.c.l.b16 %v1650
        %v1661 = vunpack.c.l.b16 %v1651
        %v1662 = vunpack.c.l.b16 %v1652
        %v1663 = vunpack.c.l.b16 %v1653
        %v1664 = vpack.c.b16 %v1660, %v1659
        %v1665 = vpack.c.b16 %v1662, %v1661
        %v1666 = vpack.c.b16 %v1663, %v1663
        %vm1669 = vcmask 293888
        %v1671 = vsel %vm1669, %v1633, 0
        %v1674 = vsel %vm1669, %v1634, 0
        %v1677 = vsel %vm1669, %v1635, 0
        %v1680 = vsel %vm1669, %v1636, 0
        %v1683 = vsel %vm1669, %v1637, 0
        %v1686 = vsel %vm1669, %v1638, 0
        %v1689 = vsel %vm1669, %v1639, 0
        %v1692 = vsel %vm1669, %v1640, 0
        %v1695 = vsel %vm1669, %v1641, 0
        %v1698 = vsel %vm1669, %v1642, 0
        %v1701 = vsel %vm1669, %v1643, 0
        %v1704 = vsel %vm1669, %v1644, 0
        %v1707 = vsel %vm1669, %v1645, 0
        %v1710 = vsel %vm1669, %v1646, 0
        %v1713 = vsel %vm1669, %v1647, 0
        %v1716 = vsel %vm1669, %v1648, 0
        %vm1718 = vcmask 1041408
        %v1720 = vsel %vm1718, %v1666, 0
        %1722 = vmatprep.subr.bf16.mxu0 0
        %1723 = vmatpush1.bf16.msra.mxu0 0
        %1724 = vmatprep.subr.bf16.mxu0 0
        %1725 = vmatpush1.bf16.msra.mxu0 0
        %1726 = vmatprep.subr.bf16.mxu0 0
        %1727 = vmatpush1.bf16.msra.mxu0 0
        %1728 = vmatprep.subr.bf16.mxu0 0
        %1729 = vmatpush1.bf16.msra.mxu0 0
        %1730 = vmatprep.subr.bf16.mxu0 0
        %1731 = vmatpush1.bf16.msra.mxu0 0
        %1732 = vmatprep.subr.bf16.mxu0 0
        %1733 = vmatpush1.bf16.msra.mxu0 %v1720
        %1734 = vmatprep.subr.bf16.mxu0 0
        %1735 = vmatpush1.bf16.msra.mxu0 %v1665
        %1736 = vmatprep.subr.bf16.mxu0 0
        %1737 = vmatpush1.bf16.msra.mxu0 %v1664
        %1738 = vmatprep.subr.bf16.mxu0 0
        %1739 = vmatpush2.bf16.msra.mxu0 0
        %1740 = vmatprep.subr.bf16.mxu0 0
        %1741 = vmatpush2.bf16.msra.mxu0 0
        %1742 = vmatprep.subr.bf16.mxu0 0
        %1743 = vmatpush2.bf16.msra.mxu0 0
        %1744 = vmatprep.subr.bf16.mxu0 0
        %1745 = vmatpush2.bf16.msra.mxu0 0
        %1746 = vmatprep.subr.bf16.mxu0 0
        %1747 = vmatpush2.bf16.msra.mxu0 0
        %1748 = vmatprep.subr.bf16.mxu0 0
        %1749 = vmatpush2.bf16.msra.mxu0 0
        %1750 = vmatprep.subr.bf16.mxu0 0
        %1751 = vmatpush2.bf16.msra.mxu0 0
        %1752 = vmatprep.subr.bf16.mxu0 0
        %1753 = vmatpush2.bf16.msra.mxu0 0
        %1754 = vmatprep.mubr.bf16.mxu0 0
        %1755 = vmatmul.mubr.bf16.gmra.mxu0 %v1671
        %v1756 = vpop.f32.mrf.mxu0
        %v1757 = vadd.f32 0.0, %v1756
        %v1758 = vpop.f32.mrf.mxu0
        %v1759 = vpop.f32.mrf.mxu0
        %v1760 = vadd.f32 0.0, %v1759
        %v1761 = vpop.f32.mrf.mxu0
        %1762 = vmatprep.mubr.bf16.mxu0 0
        %1763 = vmatmul.mubr.bf16.gmra.mxu0 %v1674
        %v1764 = vpop.f32.mrf.mxu0
        %v1765 = vadd.f32 0.0, %v1764
        %v1766 = vpop.f32.mrf.mxu0
        %v1767 = vpop.f32.mrf.mxu0
        %v1768 = vadd.f32 0.0, %v1767
        %v1769 = vpop.f32.mrf.mxu0
        %1770 = vmatprep.mubr.bf16.mxu0 0
        %1771 = vmatmul.mubr.bf16.gmra.mxu0 %v1677
        %v1772 = vpop.f32.mrf.mxu0
        %v1773 = vadd.f32 0.0, %v1772
        %v1774 = vpop.f32.mrf.mxu0
        %v1775 = vpop.f32.mrf.mxu0
        %v1776 = vadd.f32 0.0, %v1775
        %v1777 = vpop.f32.mrf.mxu0
        %1778 = vmatprep.mubr.bf16.mxu0 0
        %1779 = vmatmul.mubr.bf16.gmra.mxu0 %v1680
        %v1780 = vpop.f32.mrf.mxu0
        %v1781 = vadd.f32 0.0, %v1780
        %v1782 = vpop.f32.mrf.mxu0
        %v1783 = vpop.f32.mrf.mxu0
        %v1784 = vadd.f32 0.0, %v1783
        %v1785 = vpop.f32.mrf.mxu0
        %1786 = vmatprep.mubr.bf16.mxu0 0
        %1787 = vmatmul.mubr.bf16.gmra.mxu0 %v1683
        %v1788 = vpop.f32.mrf.mxu0
        %v1789 = vadd.f32 0.0, %v1788
        %v1790 = vpop.f32.mrf.mxu0
        %v1791 = vpop.f32.mrf.mxu0
        %v1792 = vadd.f32 0.0, %v1791
        %v1793 = vpop.f32.mrf.mxu0
        %1794 = vmatprep.mubr.bf16.mxu0 0
        %1795 = vmatmul.mubr.bf16.gmra.mxu0 %v1686
        %v1796 = vpop.f32.mrf.mxu0
        %v1797 = vadd.f32 0.0, %v1796
        %v1798 = vpop.f32.mrf.mxu0
        %v1799 = vpop.f32.mrf.mxu0
        %v1800 = vadd.f32 0.0, %v1799
        %v1801 = vpop.f32.mrf.mxu0
        %1802 = vmatprep.mubr.bf16.mxu0 0
        %1803 = vmatmul.mubr.bf16.gmra.mxu0 %v1689
        %v1804 = vpop.f32.mrf.mxu0
        %v1805 = vadd.f32 0.0, %v1804
        %v1806 = vpop.f32.mrf.mxu0
        %v1807 = vpop.f32.mrf.mxu0
        %v1808 = vadd.f32 0.0, %v1807
        %v1809 = vpop.f32.mrf.mxu0
        %1810 = vmatprep.mubr.bf16.mxu0 0
        %1811 = vmatmul.mubr.bf16.gmra.mxu0 %v1692
        %v1812 = vpop.f32.mrf.mxu0
        %v1813 = vadd.f32 0.0, %v1812
        %v1814 = vpop.f32.mrf.mxu0
        %v1815 = vpop.f32.mrf.mxu0
        %v1816 = vadd.f32 0.0, %v1815
        %v1817 = vpop.f32.mrf.mxu0
        %1818 = vmatprep.mubr.bf16.mxu0 0
        %1819 = vmatmul.mubr.bf16.gmra.mxu0 %v1695
        %v1820 = vpop.f32.mrf.mxu0
        %v1821 = vadd.f32 0.0, %v1820
        %v1822 = vpop.f32.mrf.mxu0
        %v1823 = vpop.f32.mrf.mxu0
        %v1824 = vadd.f32 0.0, %v1823
        %v1825 = vpop.f32.mrf.mxu0
        %1826 = vmatprep.mubr.bf16.mxu0 0
        %1827 = vmatmul.mubr.bf16.gmra.mxu0 %v1698
        %v1828 = vpop.f32.mrf.mxu0
        %v1829 = vadd.f32 0.0, %v1828
        %v1830 = vpop.f32.mrf.mxu0
        %v1831 = vpop.f32.mrf.mxu0
        %v1832 = vadd.f32 0.0, %v1831
        %v1833 = vpop.f32.mrf.mxu0
        %1834 = vmatprep.mubr.bf16.mxu0 0
        %1835 = vmatmul.mubr.bf16.gmra.mxu0 %v1701
        %v1836 = vpop.f32.mrf.mxu0
        %v1837 = vadd.f32 0.0, %v1836
        %v1838 = vpop.f32.mrf.mxu0
        %v1839 = vpop.f32.mrf.mxu0
        %v1840 = vadd.f32 0.0, %v1839
        %v1841 = vpop.f32.mrf.mxu0
        %1842 = vmatprep.mubr.bf16.mxu0 0
        %1843 = vmatmul.mubr.bf16.gmra.mxu0 %v1704
        %v1844 = vpop.f32.mrf.mxu0
        %v1845 = vadd.f32 0.0, %v1844
        %v1846 = vpop.f32.mrf.mxu0
        %v1847 = vpop.f32.mrf.mxu0
        %v1848 = vadd.f32 0.0, %v1847
        %v1849 = vpop.f32.mrf.mxu0
        %1850 = vmatprep.mubr.bf16.mxu0 0
        %1851 = vmatmul.mubr.bf16.gmra.mxu0 %v1707
        %v1852 = vpop.f32.mrf.mxu0
        %v1853 = vadd.f32 0.0, %v1852
        %v1854 = vpop.f32.mrf.mxu0
        %v1855 = vpop.f32.mrf.mxu0
        %v1856 = vadd.f32 0.0, %v1855
        %v1857 = vpop.f32.mrf.mxu0
        %1858 = vmatprep.mubr.bf16.mxu0 0
        %1859 = vmatmul.mubr.bf16.gmra.mxu0 %v1710
        %v1860 = vpop.f32.mrf.mxu0
        %v1861 = vadd.f32 0.0, %v1860
        %v1862 = vpop.f32.mrf.mxu0
        %v1863 = vpop.f32.mrf.mxu0
        %v1864 = vadd.f32 0.0, %v1863
        %v1865 = vpop.f32.mrf.mxu0
        %1866 = vmatprep.mubr.bf16.mxu0 0
        %1867 = vmatmul.mubr.bf16.gmra.mxu0 %v1713
        %v1868 = vpop.f32.mrf.mxu0
        %v1869 = vadd.f32 0.0, %v1868
        %v1870 = vpop.f32.mrf.mxu0
        %v1871 = vpop.f32.mrf.mxu0
        %v1872 = vadd.f32 0.0, %v1871
        %v1873 = vpop.f32.mrf.mxu0
        %1874 = vmatprep.mubr.bf16.mxu0 0
        %1875 = vmatmul.mubr.bf16.gmra.mxu0 %v1716
        %v1876 = vpop.f32.mrf.mxu0
        %v1877 = vadd.f32 0.0, %v1876
        %v1878 = vpop.f32.mrf.mxu0
        %v1879 = vpop.f32.mrf.mxu0
        %v1880 = vadd.f32 0.0, %v1879
        %v1881 = vpop.f32.mrf.mxu0
        %1882 = vdwg.mxu0
        %v1883 = vld [vmem:[%s251] sm:$0x1]
        %v1885 = vlaneseq
        %v1886 = vshrl.u32 %v1885, 7
        %v1887 = vsub.s32 0, %v1886
        %v1888 = vrot.slane %v1883, %v1887
        %v1890 = vmul.f32 %v1757, %v1888
        %v1891 = vmul.f32 %v1760, %v1888
        %v1892 = vmul.f32 %v1765, %v1888
        %v1893 = vmul.f32 %v1768, %v1888
        %v1894 = vmul.f32 %v1773, %v1888
        %v1895 = vmul.f32 %v1776, %v1888
        %v1896 = vmul.f32 %v1781, %v1888
        %v1897 = vmul.f32 %v1784, %v1888
        %v1898 = vmul.f32 %v1789, %v1888
        %v1899 = vmul.f32 %v1792, %v1888
        %v1900 = vmul.f32 %v1797, %v1888
        %v1901 = vmul.f32 %v1800, %v1888
        %v1902 = vmul.f32 %v1805, %v1888
        %v1903 = vmul.f32 %v1808, %v1888
        %v1904 = vmul.f32 %v1813, %v1888
        %v1905 = vmul.f32 %v1816, %v1888
        %v1906 = vmul.f32 %v1821, %v1888
        %v1907 = vmul.f32 %v1824, %v1888
        %v1908 = vmul.f32 %v1829, %v1888
        %v1909 = vmul.f32 %v1832, %v1888
        %v1910 = vmul.f32 %v1837, %v1888
        %v1911 = vmul.f32 %v1840, %v1888
        %v1912 = vmul.f32 %v1845, %v1888
        %v1913 = vmul.f32 %v1848, %v1888
        %v1914 = vmul.f32 %v1853, %v1888
        %v1915 = vmul.f32 %v1856, %v1888
        %v1916 = vmul.f32 %v1861, %v1888
        %v1917 = vmul.f32 %v1864, %v1888
        %v1918 = vmul.f32 %v1869, %v1888
        %v1919 = vmul.f32 %v1872, %v1888
        %v1920 = vmul.f32 %v1877, %v1888
        %v1921 = vmul.f32 %v1880, %v1888
        %v1922 = vld [vmem:[%s254] sm:$0x1]
        %v1924 = vlaneseq
        %v1925 = vshrl.u32 %v1924, 7
        %v1926 = vsub.s32 0, %v1925
        %v1927 = vrot.slane %v1922, %v1926
        %v1929 = vadd.f32 %v1890, %v1927
        %v1930 = vadd.f32 %v1891, %v1927
        %v1931 = vadd.f32 %v1892, %v1927
        %v1932 = vadd.f32 %v1893, %v1927
        %v1933 = vadd.f32 %v1894, %v1927
        %v1934 = vadd.f32 %v1895, %v1927
        %v1935 = vadd.f32 %v1896, %v1927
        %v1936 = vadd.f32 %v1897, %v1927
        %v1937 = vadd.f32 %v1898, %v1927
        %v1938 = vadd.f32 %v1899, %v1927
        %v1939 = vadd.f32 %v1900, %v1927
        %v1940 = vadd.f32 %v1901, %v1927
        %v1941 = vadd.f32 %v1902, %v1927
        %v1942 = vadd.f32 %v1903, %v1927
        %v1943 = vadd.f32 %v1904, %v1927
        %v1944 = vadd.f32 %v1905, %v1927
        %v1945 = vadd.f32 %v1906, %v1927
        %v1946 = vadd.f32 %v1907, %v1927
        %v1947 = vadd.f32 %v1908, %v1927
        %v1948 = vadd.f32 %v1909, %v1927
        %v1949 = vadd.f32 %v1910, %v1927
        %v1950 = vadd.f32 %v1911, %v1927
        %v1951 = vadd.f32 %v1912, %v1927
        %v1952 = vadd.f32 %v1913, %v1927
        %v1953 = vadd.f32 %v1914, %v1927
        %v1954 = vadd.f32 %v1915, %v1927
        %v1955 = vadd.f32 %v1916, %v1927
        %v1956 = vadd.f32 %v1917, %v1927
        %v1957 = vadd.f32 %v1918, %v1927
        %v1958 = vadd.f32 %v1919, %v1927
        %v1959 = vadd.f32 %v1920, %v1927
        %v1960 = vadd.f32 %v1921, %v1927
        %v1961 = vmax.f32 %v1929, 0.0
        %v1962 = vmax.f32 %v1930, 0.0
        %v1963 = vmax.f32 %v1931, 0.0
        %v1964 = vmax.f32 %v1932, 0.0
        %v1965 = vmax.f32 %v1933, 0.0
        %v1966 = vmax.f32 %v1934, 0.0
        %v1967 = vmax.f32 %v1935, 0.0
        %v1968 = vmax.f32 %v1936, 0.0
        %v1969 = vmax.f32 %v1937, 0.0
        %v1970 = vmax.f32 %v1938, 0.0
        %v1971 = vmax.f32 %v1939, 0.0
        %v1972 = vmax.f32 %v1940, 0.0
        %v1973 = vmax.f32 %v1941, 0.0
        %v1974 = vmax.f32 %v1942, 0.0
        %v1975 = vmax.f32 %v1943, 0.0
        %v1976 = vmax.f32 %v1944, 0.0
        %v1977 = vmax.f32 %v1945, 0.0
        %v1978 = vmax.f32 %v1946, 0.0
        %v1979 = vmax.f32 %v1947, 0.0
        %v1980 = vmax.f32 %v1948, 0.0
        %v1981 = vmax.f32 %v1949, 0.0
        %v1982 = vmax.f32 %v1950, 0.0
        %v1983 = vmax.f32 %v1951, 0.0
        %v1984 = vmax.f32 %v1952, 0.0
        %v1985 = vmax.f32 %v1953, 0.0
        %v1986 = vmax.f32 %v1954, 0.0
        %v1987 = vmax.f32 %v1955, 0.0
        %v1988 = vmax.f32 %v1956, 0.0
        %v1989 = vmax.f32 %v1957, 0.0
        %v1990 = vmax.f32 %v1958, 0.0
        %v1991 = vmax.f32 %v1959, 0.0
        %v1992 = vmax.f32 %v1960, 0.0
        %1993 = vst [vmem:[%s239] sm:$0xff] %v1961
        %1994 = vst [vmem:[%s239 + $0x8] sm:$0xff] %v1962
        %1995 = vst [vmem:[%s239 + $0x10] sm:$0xff] %v1963
        %1996 = vst [vmem:[%s239 + $0x18] sm:$0xff] %v1964
        %1997 = vst [vmem:[%s239 + $0x20] sm:$0xff] %v1965
        %1998 = vst [vmem:[%s239 + $0x28] sm:$0xff] %v1966
        %1999 = vst [vmem:[%s239 + $0x30] sm:$0xff] %v1967
        %2000 = vst [vmem:[%s239 + $0x38] sm:$0xff] %v1968
        %2001 = vst [vmem:[%s239 + $0x40] sm:$0xff] %v1969
        %2002 = vst [vmem:[%s239 + $0x48] sm:$0xff] %v1970
        %2003 = vst [vmem:[%s239 + $0x50] sm:$0xff] %v1971
        %2004 = vst [vmem:[%s239 + $0x58] sm:$0xff] %v1972
        %2005 = vst [vmem:[%s239 + $0x60] sm:$0xff] %v1973
        %2006 = vst [vmem:[%s239 + $0x68] sm:$0xff] %v1974
        %2007 = vst [vmem:[%s239 + $0x70] sm:$0xff] %v1975
        %2008 = vst [vmem:[%s239 + $0x78] sm:$0xff] %v1976
        %2009 = vst [vmem:[%s239 + $0x80] sm:$0xff] %v1977
        %2010 = vst [vmem:[%s239 + $0x88] sm:$0xff] %v1978
        %2011 = vst [vmem:[%s239 + $0x90] sm:$0xff] %v1979
        %2012 = vst [vmem:[%s239 + $0x98] sm:$0xff] %v1980
        %2013 = vst [vmem:[%s239 + $0xa0] sm:$0xff] %v1981
        %2014 = vst [vmem:[%s239 + $0xa8] sm:$0xff] %v1982
        %2015 = vst [vmem:[%s239 + $0xb0] sm:$0xff] %v1983
        %2016 = vst [vmem:[%s239 + $0xb8] sm:$0xff] %v1984
        %2017 = vst [vmem:[%s239 + $0xc0] sm:$0xff] %v1985
        %2018 = vst [vmem:[%s239 + $0xc8] sm:$0xff] %v1986
        %2019 = vst [vmem:[%s239 + $0xd0] sm:$0xff] %v1987
        %2020 = vst [vmem:[%s239 + $0xd8] sm:$0xff] %v1988
        %2021 = vst [vmem:[%s239 + $0xe0] sm:$0xff] %v1989
        %2022 = vst [vmem:[%s239 + $0xe8] sm:$0xff] %v1990
        %2023 = vst [vmem:[%s239 + $0xf0] sm:$0xff] %v1991
        %2024 = vst [vmem:[%s239 + $0xf8] sm:$0xff] %v1992
        %s2025 = sand.u32 %s144, 1
        %s2026 = scalar_lea.sflag [#allocation3], %s2025
        %s2027 = sand.u32 %s144, 1
        %s2028 = smul.addr %s2027, 256
        %s2029 = scalar_lea.vmem [#allocation2], %s2028
        // Predicated region
        $region37: #{tpu_custom_call.1} parent=35 // pred_check
          %p2030 = pneg %p154
        $region38: #{tpu_custom_call.1} parent=35 // pred_check_branch
          %2032 = sbr.rel (%p2030) target = $region40
        $region39: #{tpu_custom_call.1} parent=35 // pred_region
          %s2034 = ssub.s32 4096, 4096
          %2035 = vsyncadd %s2026, %s2034
          %s2036 = smul.addr %s22, 32
          %s2037 = sadd.s32 %s23, %s2036
          %s2038 = smul.addr %s2037, 128
          %s2039 = scalar_lea.hbm %s4, %s2038
          %s2040 = sshll.u32 %s2029, 4
          %s2041 = int_to_ptr.vmem [resolvable:$true] %s2040
          %2046 = dma.vmem_to_hbm [thread:$0]  %s2041, 4096, %s2039, %s2026, 128, 128, 8
        $region40: #{tpu_custom_call.1} parent=35 // pred_fallthru
          _
      $region36: #{tpu_custom_call.1} parent=5 // pred_fallthru
        _
      %p2047 = scmp.le.s32.totalorder 2, %s13
      // Predicated region
      $region41: #{tpu_custom_call.1} parent=5 // pred_check
        %p2048 = pneg %p2047
      $region42: #{tpu_custom_call.1} parent=5 // pred_check_branch
        %2050 = sbr.rel (%p2048) target = $region44
      $region43: #{tpu_custom_call.1} parent=5 // pred_region
        %s2051 = ssub.s32 %s13, 2
        // Predicated region
        $region45: #{tpu_custom_call.1} parent=43 // pred_check
          %p2052 = pneg %p160
        $region46: #{tpu_custom_call.1} parent=43 // pred_check_branch
          %2054 = sbr.rel (%p2052) target = $region48
        $region47: #{tpu_custom_call.1} parent=43 // pred_region
          %s2055 = sand.u32 %s145, 1
          %s2056 = scalar_lea.sflag [#allocation3], %s2055
          %s2057 = sand.u32 %s145, 1
          %s2058 = smul.addr %s2057, 256
          %s2059 = scalar_lea.vmem [#allocation2], %s2058
          %2060 = dma.done %s2056, 4096
        $region48: #{tpu_custom_call.1} parent=43 // pred_fallthru
          _
      $region44: #{tpu_custom_call.1} parent=5 // pred_fallthru
        _
    $region6: #{tpu_custom_call.1} parent=1 // loop_footer
      %s17 = sadd.s32 1, %s13
    $region7: #{tpu_custom_call.1} parent=1 // loop_footer_branch
      %12 = sbr.rel target = $region3
    $region8: #{tpu_custom_call.1} parent=1 // loop_exit
      _
    %2061 = vsyncpa [#allocation3], 1
    %s2062 = scalar_lea.sflag [#allocation3], 1
    %2063 = vsyncpa %s2062, 1

</llo_original>
